<compile_context>
chip_gen: v7x
topology: tpu7x:2x2x1
jax: 0.10.0
libtpu: 0.0.40
codegen_flags: <defaults>
</compile_context>

<pallas_src>
import functools

import jax
import jax.numpy as jnp
from jax.experimental import pallas as pl
from jax.experimental.pallas import tpu as pltpu

LATENT_DIM = 3
IN_DIM = 32 * 32
HID = 100

# (fan_in, fan_out) for the 10 linear layers: encoder (5) + decoder (5)
LAYER_DIMS = [
    (IN_DIM, HID), (HID, HID), (HID, HID), (HID, HID), (HID, LATENT_DIM),
    (LATENT_DIM, HID), (HID, HID), (HID, HID), (HID, HID), (HID, IN_DIM),
]
# activation applied AFTER each layer
LAYER_ACT = ['relu', 'relu', 'relu', 'relu', 'none',
             'relu', 'relu', 'relu', 'relu', 'sigmoid']
N_LAYERS = len(LAYER_DIMS)

# Lane-friendly padded dims; zero padding is exact for this network.
# Latent padded all the way to 128 so every hidden tile is lane-dense (tile,128).
_PAD = {IN_DIM: IN_DIM, HID: 128, LATENT_DIM: 128}
PADDED_DIMS = [(_PAD[i], _PAD[o]) for (i, o) in LAYER_DIMS]

# Activations for the packed middle layers (logical layers 1..8);
# layer 4 is the encoder output (no activation).
MID_ACT = ('relu', 'relu', 'relu', 'none', 'relu', 'relu', 'relu', 'relu')


def _round_up(n, m):
    return ((n + m - 1) // m) * m


def _cdiv(a, b):
    return -(-a // b)


def _vmem_capacity_bytes():
    try:
        return int(pltpu.get_tpu_info().vmem_capacity_bytes)
    except Exception:
        return 64 * 1024 * 1024  # conservative: v7x per-TensorCore VMEM


_VMEM_CAP = _vmem_capacity_bytes()
# Never request more than ~75% of physical VMEM (compiler needs internal scratch).
_VMEM_REQUEST_CAP = int(_VMEM_CAP * 0.75)
# Big tiles on 128 MiB parts (v5e/v6e); keep v7x (64 MiB) at <= 768 rows.
_TILE_CAP = 1024 if _VMEM_CAP >= (100 << 20) else 768


def _choose_tiling(B, target_tile, min_grid=2):
    """Pick (tile, grid) from the real batch: grid first, then tile.

    Guarantees grid >= min_grid (megacore sharding / pipeline overlap) and a
    sublane-aligned tile, while minimizing zero-row padding.
    """
    grid = max(min_grid, _cdiv(B, target_tile))
    tile = _round_up(_cdiv(B, grid), 8)
    tile = max(8, min(tile, _round_up(_TILE_CAP, 8)))
    grid = max(min_grid, _cdiv(B, tile))
    return tile, grid


def _autoencoder_kernel(x_ref, wf_ref, wm_ref, bh_ref, wl_ref, bl_ref, o_ref):
    """Fused 10-layer MLP autoencoder forward on one batch tile.

    x_ref : (tile, 1024)  input dtype (f32 or bf16)
    wf_ref: (1024, 128)   bf16   layer 0 weight
    wm_ref: (8, 128, 128) bf16   layers 1..8 weights (stacked)
    bh_ref: (9, 128)      bf16   layers 0..8 biases (stacked)
    wl_ref: (128, 1024)   bf16   layer 9 weight
    bl_ref: (1, 1024)     f32    layer 9 bias
    o_ref : (tile, 1024)  output dtype
    """
    cdt = wf_ref.dtype  # compute dtype for the matmul inputs / hidden activations

    h = x_ref[...]
    if h.dtype != cdt:
        h = h.astype(cdt)

    # Layer 0: 1024 -> 128, ReLU.  bias-add + ReLU in bf16.
    z = jnp.dot(h, wf_ref[...], preferred_element_type=jnp.float32)
    h = jnp.maximum(z.astype(cdt) + bh_ref[0:1, :], 0)

    # Layers 1..8: 128 -> 128 (logical layer 4 = encoder output, no activation).
    for li in range(8):
        z = jnp.dot(h, wm_ref[li], preferred_element_type=jnp.float32)
        h = z.astype(cdt) + bh_ref[li + 1:li + 2, :]
        if MID_ACT[li] == 'relu':
            h = jnp.maximum(h, 0)

    # Layer 9: 128 -> 1024, f32 bias, sigmoid via tanh (single EUP op, no divide).
    z = jnp.dot(h, wl_ref[...], preferred_element_type=jnp.float32) + bl_ref[...]
    o_ref[...] = (0.5 * jnp.tanh(0.5 * z) + 0.5).astype(o_ref.dtype)


def init_params(key):
    """PyTorch-default-style init: U(-1/sqrt(fan_in), +1/sqrt(fan_in)).

    Returns a flat list [w0, b0, ..., w9, b9] at the LOGICAL sizes, with
    weights transposed to (in, out) and biases shaped (1, out).
    """
    params = []
    for (fan_in, fan_out) in LAYER_DIMS:
        key, kw, kb = jax.random.split(key, 3)
        bound = 1.0 / jnp.sqrt(jnp.asarray(fan_in, jnp.float32))
        w = jax.random.uniform(kw, (fan_in, fan_out), jnp.float32, -bound, bound)
        b = jax.random.uniform(kb, (1, fan_out), jnp.float32, -bound, bound)
        params.extend([w, b])
    return params


def pack_params(logical_params, compute_dtype=jnp.bfloat16):
    """Zero-pad to lane-friendly dims and pack into 5 arrays.

    Returns (w_first, w_mid, b_hidden, w_last, b_last):
      w_first  (1024, 128)   compute_dtype
      w_mid    (8, 128, 128) compute_dtype   (logical layers 1..8)
      b_hidden (9, 128)      compute_dtype   (logical layers 0..8)
      w_last   (128, 1024)   compute_dtype
      b_last   (1, 1024)     float32
    Zero columns/rows + zero bias entries keep the forward pass mathematically
    identical to the unpadded network.
    """
    ws, bs = [], []
    for li, (fi, fo) in enumerate(LAYER_DIMS):
        w, b = logical_params[2 * li], logical_params[2 * li + 1]
        pi, po = PADDED_DIMS[li]
        ws.append(jnp.zeros((pi, po), jnp.float32).at[:fi, :fo].set(w))
        bs.append(jnp.zeros((1, po), jnp.float32).at[:, :fo].set(b))

    w_first = ws[0].astype(compute_dtype)
    w_mid = jnp.stack(ws[1:9], axis=0).astype(compute_dtype)
    w_last = ws[9].astype(compute_dtype)
    b_hidden = jnp.concatenate(bs[0:9], axis=0).astype(compute_dtype)
    b_last = bs[9]  # stays f32 (pre-sigmoid layer kept in f32)
    return (w_first, w_mid, b_hidden, w_last, b_last)


@functools.partial(jax.jit, static_argnames=("target_tile", "out_dtype"))
def autoencoder_forward(x, params, *, target_tile=512, out_dtype=None):
    """x: (B, 1024) float32 or bfloat16.  params: tuple from pack_params.

    Returns decoded (B, 1024) in `out_dtype` (defaults to x.dtype), values in [0, 1].
    """
    wf, wm, bh, wl, bl = params
    B, D = x.shape
    assert D == IN_DIM
    out_dtype = x.dtype if out_dtype is None else out_dtype

    tile, grid_n = _choose_tiling(B, target_tile)
    padded_B = tile * grid_n
    if padded_B != B:
        x = jnp.pad(x, ((0, padded_B - B), (0, 0)))

    # x / out tiled along batch; every parameter is a full-array block with a
    # constant index_map (resident in VMEM, no re-DMA across grid steps).
    in_specs = [
        pl.BlockSpec((tile, IN_DIM), lambda i: (i, 0)),     # x
        pl.BlockSpec(wf.shape, lambda i: (0, 0)),           # w_first
        pl.BlockSpec(wm.shape, lambda i: (0, 0, 0)),        # w_mid
        pl.BlockSpec(bh.shape, lambda i: (0, 0)),           # b_hidden
        pl.BlockSpec(wl.shape, lambda i: (0, 0)),           # w_last
        pl.BlockSpec(bl.shape, lambda i: (0, 0)),           # b_last
    ]
    out_spec = pl.BlockSpec((tile, IN_DIM), lambda i: (i, 0))

    param_bytes = sum(int(p.size) * p.dtype.itemsize for p in params)
    x_bytes = x.dtype.itemsize
    o_bytes = jnp.dtype(out_dtype).itemsize
    io_bytes = padded_B * IN_DIM * (x_bytes + o_bytes)
    flops = 2 * padded_B * (int(wf.size) + int(wm.size) + int(wl.size))
    cost = pl.CostEstimate(
        flops=int(flops),
        transcendentals=int(padded_B * IN_DIM),   # final tanh-based sigmoid
        bytes_accessed=int(io_bytes + param_bytes),
    )

    # VMEM budget: double-buffered x/out tiles, resident params (x2 headroom),
    # f32 intermediates for the 1024-wide first/last layers, plus slack.
    vmem_est = (2 * tile * IN_DIM * x_bytes
                + 2 * tile * IN_DIM * o_bytes
                + 2 * param_bytes
                + 3 * tile * IN_DIM * 4
                + (4 << 20))
    vmem_limit = int(min(max(vmem_est, 16 << 20), _VMEM_REQUEST_CAP))

    out = pl.pallas_call(
        _autoencoder_kernel,
        out_shape=jax.ShapeDtypeStruct((padded_B, IN_DIM), out_dtype),
        grid_spec=pltpu.PrefetchScalarGridSpec(
            num_scalar_prefetch=0,
            grid=(grid_n,),
            in_specs=in_specs,
            out_specs=out_spec,
        ),
        compiler_params=pltpu.CompilerParams(
            dimension_semantics=("parallel",),
            vmem_limit_bytes=vmem_limit,
        ),
        cost_estimate=cost,
    )(x, wf, wm, bh, wl, bl)

    return out[:B] if padded_B != B else out


def autoencoder_reference_f32(x, logical_params):
    """Pure-f32 reference on the unpadded weights (PyTorch module semantics)."""
    h = x.astype(jnp.float32)
    for li in range(N_LAYERS):
        w, b = logical_params[2 * li], logical_params[2 * li + 1]
        h = h @ w + b
        if LAYER_ACT[li] == 'relu':
            h = jnp.maximum(h, 0.0)
        elif LAYER_ACT[li] == 'sigmoid':
            h = jax.nn.sigmoid(h)
    return h


def autoencoder_reference_matched(x, packed, out_dtype=None):
    """Reference mirroring the kernel's exact dtype handling."""
    wf, wm, bh, wl, bl = packed
    cdt = wf.dtype
    out_dtype = x.dtype if out_dtype is None else out_dtype

    h = x.astype(cdt)
    z = jnp.dot(h, wf, preferred_element_type=jnp.float32)
    h = jnp.maximum(z.astype(cdt) + bh[0:1, :], 0)
    for li in range(8):
        z = jnp.dot(h, wm[li], preferred_element_type=jnp.float32)
        h = z.astype(cdt) + bh[li + 1:li + 2, :]
        if MID_ACT[li] == 'relu':
            h = jnp.maximum(h, 0)
    z = jnp.dot(h, wl, preferred_element_type=jnp.float32) + bl
    return (0.5 * jnp.tanh(0.5 * z) + 0.5).astype(out_dtype)


if __name__ == "__main__":
    key = jax.random.PRNGKey(0)
    key, kp, kx = jax.random.split(key, 3)

    logical_params = init_params(kp)
    params = pack_params(logical_params, compute_dtype=jnp.bfloat16)

    # Small demo batch + a batch that isn't a multiple of the tile, to exercise
    # the grid>=2 / minimal-padding tiling path (B=300 -> tile=152, grid=2).
    for B in (8, 300):
        kx, kxi = jax.random.split(kx)
        x = jax.random.uniform(kxi, (B, IN_DIM), jnp.float32)

        out = jax.block_until_ready(autoencoder_forward(x, params))

        assert out.shape == (B, IN_DIM), out.shape
        assert out.dtype == jnp.float32, out.dtype
        assert bool(jnp.all(jnp.isfinite(out)))

        ref_m = autoencoder_reference_matched(x, params)
        ref_f = autoencoder_reference_f32(x, logical_params)
        err_m = float(jnp.max(jnp.abs(out - ref_m)))
        err_f = float(jnp.max(jnp.abs(out - ref_f)))
        # Tight check vs. the precision-matched reference.
        assert err_m < 5e-3, ("matched-ref mismatch", B, err_m)
        # Loose check vs. pure-f32 module semantics (bf16 weight/activation rounding).
        assert err_f < 6e-2, ("f32-ref mismatch", B, err_f)

    # bf16 I/O interface path: halves x/out HBM streaming (biggest win on v5e).
    kx, kxi = jax.random.split(kx)
    xb = jax.random.uniform(kxi, (64, IN_DIM), jnp.float32)
    out_f32 = autoencoder_forward(xb, params)
    out_bf16 = jax.block_until_ready(autoencoder_forward(xb.astype(jnp.bfloat16), params))
    assert out_bf16.shape == (64, IN_DIM)
    assert out_bf16.dtype == jnp.bfloat16
    err_b = float(jnp.max(jnp.abs(out_bf16.astype(jnp.float32) - out_f32)))
    assert err_b < 2e-2, ("bf16-io mismatch", err_b)

    print("KERNEL_OK")
</pallas_src>

<mosaic_0001>
module attributes {stable_mosaic.version = 11 : i64} {
  func.func @_autoencoder_kernel(%arg0: i32, %arg1: memref<8x1024xf32, #tpu.memory_space<vmem>>, %arg2: memref<1024x128xbf16, #tpu.memory_space<vmem>>, %arg3: memref<8x128x128xbf16, #tpu.memory_space<vmem>>, %arg4: memref<9x128xbf16, #tpu.memory_space<vmem>>, %arg5: memref<128x1024xbf16, #tpu.memory_space<vmem>>, %arg6: memref<1x1024xf32, #tpu.memory_space<vmem>>, %arg7: memref<8x1024xf32, #tpu.memory_space<vmem>>) attributes {dimension_semantics = [#tpu.dimension_semantics<parallel>], iteration_bounds = array<i64: 2>, scalar_prefetch = 0 : i64, scratch_operands = 0 : i64, tpu.core_type = #tpu.core_type<tc>, window_params = [{transform_indices = @transform_0, window_bounds = array<i64: 8, 1024>}, {pipeline_mode = #tpu.pipeline_mode<synchronous>, transform_indices = @transform_1, window_bounds = array<i64: 1024, 128>}, {pipeline_mode = #tpu.pipeline_mode<synchronous>, transform_indices = @transform_2, window_bounds = array<i64: 8, 128, 128>}, {pipeline_mode = #tpu.pipeline_mode<synchronous>, transform_indices = @transform_3, window_bounds = array<i64: 9, 128>}, {pipeline_mode = #tpu.pipeline_mode<synchronous>, transform_indices = @transform_4, window_bounds = array<i64: 128, 1024>}, {pipeline_mode = #tpu.pipeline_mode<synchronous>, transform_indices = @transform_5, window_bounds = array<i64: 1, 1024>}, {transform_indices = @transform_6, window_bounds = array<i64: 8, 1024>}]} {
    %c0 = arith.constant 0 : index
    %c0_0 = arith.constant 0 : index
    %0 = vector.load %arg1[%c0, %c0_0] : memref<8x1024xf32, #tpu.memory_space<vmem>>, vector<8x1024xf32>
    %1 = arith.truncf %0 : vector<8x1024xf32> to vector<8x1024xbf16>
    %c0_1 = arith.constant 0 : index
    %c0_2 = arith.constant 0 : index
    %2 = vector.load %arg2[%c0_1, %c0_2] : memref<1024x128xbf16, #tpu.memory_space<vmem>>, vector<1024x128xbf16>
    %cst = arith.constant dense<0.000000e+00> : vector<8x128xf32>
    %3 = tpu.matmul %1, %2, %cst {dimension_numbers = #tpu.dot_dimension_numbers<[1], [0], [0], [1], [0, 0, 1, 1], [], []>} : vector<8x1024xbf16>, vector<1024x128xbf16>, vector<8x128xf32> -> vector<8x128xf32>
    %4 = arith.truncf %3 : vector<8x128xf32> to vector<8x128xbf16>
    %c0_3 = arith.constant 0 : index
    %c0_4 = arith.constant 0 : index
    %5 = vector.load %arg4[%c0_3, %c0_4] : memref<9x128xbf16, #tpu.memory_space<vmem>>, vector<1x128xbf16>
    %6 = vector.broadcast %5 : vector<1x128xbf16> to vector<8x128xbf16>
    %7 = arith.addf %4, %6 : vector<8x128xbf16>
    %cst_5 = arith.constant 0.000000e+00 : bf16
    %8 = vector.broadcast %cst_5 : bf16 to vector<8x128xbf16>
    %9 = arith.maximumf %7, %8 : vector<8x128xbf16>
    %c0_6 = arith.constant 0 : index
    %c0_7 = arith.constant 0 : index
    %c0_8 = arith.constant 0 : index
    %10 = vector.load %arg3[%c0_6, %c0_7, %c0_8] : memref<8x128x128xbf16, #tpu.memory_space<vmem>>, vector<1x128x128xbf16>
    %11 = vector.shape_cast %10 : vector<1x128x128xbf16> to vector<128x128xbf16>
    %cst_9 = arith.constant dense<0.000000e+00> : vector<8x128xf32>
    %12 = tpu.matmul %9, %11, %cst_9 {dimension_numbers = #tpu.dot_dimension_numbers<[1], [0], [0], [1], [0, 0, 1, 1], [], []>} : vector<8x128xbf16>, vector<128x128xbf16>, vector<8x128xf32> -> vector<8x128xf32>
    %13 = arith.truncf %12 : vector<8x128xf32> to vector<8x128xbf16>
    %c1 = arith.constant 1 : index
    %c0_10 = arith.constant 0 : index
    %14 = vector.load %arg4[%c1, %c0_10] : memref<9x128xbf16, #tpu.memory_space<vmem>>, vector<1x128xbf16>
    %15 = vector.broadcast %14 : vector<1x128xbf16> to vector<8x128xbf16>
    %16 = arith.addf %13, %15 : vector<8x128xbf16>
    %cst_11 = arith.constant 0.000000e+00 : bf16
    %17 = vector.broadcast %cst_11 : bf16 to vector<8x128xbf16>
    %18 = arith.maximumf %16, %17 : vector<8x128xbf16>
    %c1_12 = arith.constant 1 : index
    %c0_13 = arith.constant 0 : index
    %c0_14 = arith.constant 0 : index
    %19 = vector.load %arg3[%c1_12, %c0_13, %c0_14] : memref<8x128x128xbf16, #tpu.memory_space<vmem>>, vector<1x128x128xbf16>
    %20 = vector.shape_cast %19 : vector<1x128x128xbf16> to vector<128x128xbf16>
    %cst_15 = arith.constant dense<0.000000e+00> : vector<8x128xf32>
    %21 = tpu.matmul %18, %20, %cst_15 {dimension_numbers = #tpu.dot_dimension_numbers<[1], [0], [0], [1], [0, 0, 1, 1], [], []>} : vector<8x128xbf16>, vector<128x128xbf16>, vector<8x128xf32> -> vector<8x128xf32>
    %22 = arith.truncf %21 : vector<8x128xf32> to vector<8x128xbf16>
    %c2 = arith.constant 2 : index
    %c0_16 = arith.constant 0 : index
    %23 = vector.load %arg4[%c2, %c0_16] : memref<9x128xbf16, #tpu.memory_space<vmem>>, vector<1x128xbf16>
    %24 = vector.broadcast %23 : vector<1x128xbf16> to vector<8x128xbf16>
    %25 = arith.addf %22, %24 : vector<8x128xbf16>
    %cst_17 = arith.constant 0.000000e+00 : bf16
    %26 = vector.broadcast %cst_17 : bf16 to vector<8x128xbf16>
    %27 = arith.maximumf %25, %26 : vector<8x128xbf16>
    %c2_18 = arith.constant 2 : index
    %c0_19 = arith.constant 0 : index
    %c0_20 = arith.constant 0 : index
    %28 = vector.load %arg3[%c2_18, %c0_19, %c0_20] : memref<8x128x128xbf16, #tpu.memory_space<vmem>>, vector<1x128x128xbf16>
    %29 = vector.shape_cast %28 : vector<1x128x128xbf16> to vector<128x128xbf16>
    %cst_21 = arith.constant dense<0.000000e+00> : vector<8x128xf32>
    %30 = tpu.matmul %27, %29, %cst_21 {dimension_numbers = #tpu.dot_dimension_numbers<[1], [0], [0], [1], [0, 0, 1, 1], [], []>} : vector<8x128xbf16>, vector<128x128xbf16>, vector<8x128xf32> -> vector<8x128xf32>
    %31 = arith.truncf %30 : vector<8x128xf32> to vector<8x128xbf16>
    %c3 = arith.constant 3 : index
    %c0_22 = arith.constant 0 : index
    %32 = vector.load %arg4[%c3, %c0_22] : memref<9x128xbf16, #tpu.memory_space<vmem>>, vector<1x128xbf16>
    %33 = vector.broadcast %32 : vector<1x128xbf16> to vector<8x128xbf16>
    %34 = arith.addf %31, %33 : vector<8x128xbf16>
    %cst_23 = arith.constant 0.000000e+00 : bf16
    %35 = vector.broadcast %cst_23 : bf16 to vector<8x128xbf16>
    %36 = arith.maximumf %34, %35 : vector<8x128xbf16>
    %c3_24 = arith.constant 3 : index
    %c0_25 = arith.constant 0 : index
    %c0_26 = arith.constant 0 : index
    %37 = vector.load %arg3[%c3_24, %c0_25, %c0_26] : memref<8x128x128xbf16, #tpu.memory_space<vmem>>, vector<1x128x128xbf16>
    %38 = vector.shape_cast %37 : vector<1x128x128xbf16> to vector<128x128xbf16>
    %cst_27 = arith.constant dense<0.000000e+00> : vector<8x128xf32>
    %39 = tpu.matmul %36, %38, %cst_27 {dimension_numbers = #tpu.dot_dimension_numbers<[1], [0], [0], [1], [0, 0, 1, 1], [], []>} : vector<8x128xbf16>, vector<128x128xbf16>, vector<8x128xf32> -> vector<8x128xf32>
    %40 = arith.truncf %39 : vector<8x128xf32> to vector<8x128xbf16>
    %c4 = arith.constant 4 : index
    %c0_28 = arith.constant 0 : index
    %41 = vector.load %arg4[%c4, %c0_28] : memref<9x128xbf16, #tpu.memory_space<vmem>>, vector<1x128xbf16>
    %42 = vector.broadcast %41 : vector<1x128xbf16> to vector<8x128xbf16>
    %43 = arith.addf %40, %42 : vector<8x128xbf16>
    %c4_29 = arith.constant 4 : index
    %c0_30 = arith.constant 0 : index
    %c0_31 = arith.constant 0 : index
    %44 = vector.load %arg3[%c4_29, %c0_30, %c0_31] : memref<8x128x128xbf16, #tpu.memory_space<vmem>>, vector<1x128x128xbf16>
    %45 = vector.shape_cast %44 : vector<1x128x128xbf16> to vector<128x128xbf16>
    %cst_32 = arith.constant dense<0.000000e+00> : vector<8x128xf32>
    %46 = tpu.matmul %43, %45, %cst_32 {dimension_numbers = #tpu.dot_dimension_numbers<[1], [0], [0], [1], [0, 0, 1, 1], [], []>} : vector<8x128xbf16>, vector<128x128xbf16>, vector<8x128xf32> -> vector<8x128xf32>
    %47 = arith.truncf %46 : vector<8x128xf32> to vector<8x128xbf16>
    %c5 = arith.constant 5 : index
    %c0_33 = arith.constant 0 : index
    %48 = vector.load %arg4[%c5, %c0_33] : memref<9x128xbf16, #tpu.memory_space<vmem>>, vector<1x128xbf16>
    %49 = vector.broadcast %48 : vector<1x128xbf16> to vector<8x128xbf16>
    %50 = arith.addf %47, %49 : vector<8x128xbf16>
    %cst_34 = arith.constant 0.000000e+00 : bf16
    %51 = vector.broadcast %cst_34 : bf16 to vector<8x128xbf16>
    %52 = arith.maximumf %50, %51 : vector<8x128xbf16>
    %c5_35 = arith.constant 5 : index
    %c0_36 = arith.constant 0 : index
    %c0_37 = arith.constant 0 : index
    %53 = vector.load %arg3[%c5_35, %c0_36, %c0_37] : memref<8x128x128xbf16, #tpu.memory_space<vmem>>, vector<1x128x128xbf16>
    %54 = vector.shape_cast %53 : vector<1x128x128xbf16> to vector<128x128xbf16>
    %cst_38 = arith.constant dense<0.000000e+00> : vector<8x128xf32>
    %55 = tpu.matmul %52, %54, %cst_38 {dimension_numbers = #tpu.dot_dimension_numbers<[1], [0], [0], [1], [0, 0, 1, 1], [], []>} : vector<8x128xbf16>, vector<128x128xbf16>, vector<8x128xf32> -> vector<8x128xf32>
    %56 = arith.truncf %55 : vector<8x128xf32> to vector<8x128xbf16>
    %c6 = arith.constant 6 : index
    %c0_39 = arith.constant 0 : index
    %57 = vector.load %arg4[%c6, %c0_39] : memref<9x128xbf16, #tpu.memory_space<vmem>>, vector<1x128xbf16>
    %58 = vector.broadcast %57 : vector<1x128xbf16> to vector<8x128xbf16>
    %59 = arith.addf %56, %58 : vector<8x128xbf16>
    %cst_40 = arith.constant 0.000000e+00 : bf16
    %60 = vector.broadcast %cst_40 : bf16 to vector<8x128xbf16>
    %61 = arith.maximumf %59, %60 : vector<8x128xbf16>
    %c6_41 = arith.constant 6 : index
    %c0_42 = arith.constant 0 : index
    %c0_43 = arith.constant 0 : index
    %62 = vector.load %arg3[%c6_41, %c0_42, %c0_43] : memref<8x128x128xbf16, #tpu.memory_space<vmem>>, vector<1x128x128xbf16>
    %63 = vector.shape_cast %62 : vector<1x128x128xbf16> to vector<128x128xbf16>
    %cst_44 = arith.constant dense<0.000000e+00> : vector<8x128xf32>
    %64 = tpu.matmul %61, %63, %cst_44 {dimension_numbers = #tpu.dot_dimension_numbers<[1], [0], [0], [1], [0, 0, 1, 1], [], []>} : vector<8x128xbf16>, vector<128x128xbf16>, vector<8x128xf32> -> vector<8x128xf32>
    %65 = arith.truncf %64 : vector<8x128xf32> to vector<8x128xbf16>
    %c7 = arith.constant 7 : index
    %c0_45 = arith.constant 0 : index
    %66 = vector.load %arg4[%c7, %c0_45] : memref<9x128xbf16, #tpu.memory_space<vmem>>, vector<1x128xbf16>
    %67 = vector.broadcast %66 : vector<1x128xbf16> to vector<8x128xbf16>
    %68 = arith.addf %65, %67 : vector<8x128xbf16>
    %cst_46 = arith.constant 0.000000e+00 : bf16
    %69 = vector.broadcast %cst_46 : bf16 to vector<8x128xbf16>
    %70 = arith.maximumf %68, %69 : vector<8x128xbf16>
    %c7_47 = arith.constant 7 : index
    %c0_48 = arith.constant 0 : index
    %c0_49 = arith.constant 0 : index
    %71 = vector.load %arg3[%c7_47, %c0_48, %c0_49] : memref<8x128x128xbf16, #tpu.memory_space<vmem>>, vector<1x128x128xbf16>
    %72 = vector.shape_cast %71 : vector<1x128x128xbf16> to vector<128x128xbf16>
    %cst_50 = arith.constant dense<0.000000e+00> : vector<8x128xf32>
    %73 = tpu.matmul %70, %72, %cst_50 {dimension_numbers = #tpu.dot_dimension_numbers<[1], [0], [0], [1], [0, 0, 1, 1], [], []>} : vector<8x128xbf16>, vector<128x128xbf16>, vector<8x128xf32> -> vector<8x128xf32>
    %74 = arith.truncf %73 : vector<8x128xf32> to vector<8x128xbf16>
    %c8 = arith.constant 8 : index
    %c0_51 = arith.constant 0 : index
    %75 = vector.load %arg4[%c8, %c0_51] : memref<9x128xbf16, #tpu.memory_space<vmem>>, vector<1x128xbf16>
    %76 = vector.broadcast %75 : vector<1x128xbf16> to vector<8x128xbf16>
    %77 = arith.addf %74, %76 : vector<8x128xbf16>
    %cst_52 = arith.constant 0.000000e+00 : bf16
    %78 = vector.broadcast %cst_52 : bf16 to vector<8x128xbf16>
    %79 = arith.maximumf %77, %78 : vector<8x128xbf16>
    %c0_53 = arith.constant 0 : index
    %c0_54 = arith.constant 0 : index
    %80 = vector.load %arg5[%c0_53, %c0_54] : memref<128x1024xbf16, #tpu.memory_space<vmem>>, vector<128x1024xbf16>
    %cst_55 = arith.constant dense<0.000000e+00> : vector<8x1024xf32>
    %81 = tpu.matmul %79, %80, %cst_55 {dimension_numbers = #tpu.dot_dimension_numbers<[1], [0], [0], [1], [0, 0, 1, 1], [], []>} : vector<8x128xbf16>, vector<128x1024xbf16>, vector<8x1024xf32> -> vector<8x1024xf32>
    %c0_56 = arith.constant 0 : index
    %c0_57 = arith.constant 0 : index
    %82 = vector.load %arg6[%c0_56, %c0_57] : memref<1x1024xf32, #tpu.memory_space<vmem>>, vector<1x1024xf32>
    %83 = vector.broadcast %82 : vector<1x1024xf32> to vector<8x1024xf32>
    %84 = arith.addf %81, %83 : vector<8x1024xf32>
    %cst_58 = arith.constant 5.000000e-01 : f32
    %85 = vector.broadcast %cst_58 : f32 to vector<8x1024xf32>
    %86 = arith.mulf %85, %84 : vector<8x1024xf32>
    %87 = math.tanh %86 : vector<8x1024xf32>
    %cst_59 = arith.constant 5.000000e-01 : f32
    %88 = vector.broadcast %cst_59 : f32 to vector<8x1024xf32>
    %89 = arith.mulf %88, %87 : vector<8x1024xf32>
    %cst_60 = arith.constant 5.000000e-01 : f32
    %90 = vector.broadcast %cst_60 : f32 to vector<8x1024xf32>
    %91 = arith.addf %89, %90 : vector<8x1024xf32>
    %c0_61 = arith.constant 0 : index
    %c0_62 = arith.constant 0 : index
    %92 = vector.load %arg7[%c0_61, %c0_62] : memref<8x1024xf32, #tpu.memory_space<vmem>>, vector<8x1024xf32>
    tpu.vector_store %arg7[%c0_61, %c0_62], %91 {strides = array<i32>} : memref<8x1024xf32, #tpu.memory_space<vmem>>, vector<8x1024xf32>,
    return
  }
  func.func @transform_0(%arg0: i32) -> (i32, i32) {
    %c0_i32 = arith.constant 0 : i32
    %c0_i32_0 = arith.constant 0 : i32
    return %arg0, %c0_i32 : i32, i32
  }
  func.func @transform_1(%arg0: i32) -> (i32, i32) {
    %c0_i32 = arith.constant 0 : i32
    %c0_i32_0 = arith.constant 0 : i32
    %c0_i32_1 = arith.constant 0 : i32
    return %c0_i32, %c0_i32_0 : i32, i32
  }
  func.func @transform_2(%arg0: i32) -> (i32, i32, i32) {
    %c0_i32 = arith.constant 0 : i32
    %c0_i32_0 = arith.constant 0 : i32
    %c0_i32_1 = arith.constant 0 : i32
    %c0_i32_2 = arith.constant 0 : i32
    return %c0_i32, %c0_i32_0, %c0_i32_1 : i32, i32, i32
  }
  func.func @transform_3(%arg0: i32) -> (i32, i32) {
    %c0_i32 = arith.constant 0 : i32
    %c0_i32_0 = arith.constant 0 : i32
    %c0_i32_1 = arith.constant 0 : i32
    return %c0_i32, %c0_i32_0 : i32, i32
  }
  func.func @transform_4(%arg0: i32) -> (i32, i32) {
    %c0_i32 = arith.constant 0 : i32
    %c0_i32_0 = arith.constant 0 : i32
    %c0_i32_1 = arith.constant 0 : i32
    return %c0_i32, %c0_i32_0 : i32, i32
  }
  func.func @transform_5(%arg0: i32) -> (i32, i32) {
    %c0_i32 = arith.constant 0 : i32
    %c0_i32_0 = arith.constant 0 : i32
    %c0_i32_1 = arith.constant 0 : i32
    return %c0_i32, %c0_i32_0 : i32, i32
  }
  func.func @transform_6(%arg0: i32) -> (i32, i32) {
    %c0_i32 = arith.constant 0 : i32
    %c0_i32_0 = arith.constant 0 : i32
    return %arg0, %c0_i32 : i32, i32
  }
}

</mosaic_0001>

<llo_original>
// kernel: autoencoder_forward.1
$region0: #{autoencoder_forward.1}
  #allocation0 [shape = 'u32[]', space=smem, size = 0x4, offset = 0x4, fixed_abs, tag = 'smem constant byte address 0x4 - core index']
  #allocation1 [shape = 'u32[144,128]{1,0:T(1,128)}', space=vmem, size = 0x12000, scoped, tag = 'internal scratch']
  %s0 = inlined_call_operand.vmem [shape: f32[16,1024], index: 0, kind: input, shape index: {}]
  %s1 = inlined_call_operand.hbm [shape: bf16[1024,128], index: 1, kind: input, shape index: {}]
  %s2 = inlined_call_operand.hbm [shape: bf16[8,128,128], index: 2, kind: input, shape index: {}]
  %s3 = inlined_call_operand.vmem [shape: bf16[9,128], index: 3, kind: input, shape index: {}]
  %s4 = inlined_call_operand.hbm [shape: bf16[128,1024], index: 4, kind: input, shape index: {}]
  %s5 = inlined_call_operand.vmem [shape: f32[1,1024], index: 5, kind: input, shape index: {}]
  %s6 = inlined_call_operand.vmem [shape: f32[16,1024], index: 6, kind: output, shape index: {}]
  %s7 = sld [smem:[#allocation0]]
  $region69: #{autoencoder_forward.1} parent=0
    _
  %s9 = ssub.s32 1, %s7
  %s10 = scalar_select 0, %s9, %s7
  $region1: #{autoencoder_forward.1} parent=0
    #allocation2 [shape = 'u8[262144]{0}', space=vmem, size = 0x40000, scoped, tag = 'input window, operand 1, single buffered']
    #allocation3 [shape = 's32[2]{0}', space=sflag, size = 0x8, scoped, tag = 'scoped memory for autoencoder_forward.1']
    #allocation4 [shape = 'u8[262144]{0}', space=vmem, size = 0x40000, scoped, tag = 'input window, operand 2, single buffered']
    #allocation5 [shape = 's32[1]{0}', space=sflag, size = 0x4, scoped, tag = 'scoped memory for autoencoder_forward.1']
    #allocation6 [shape = 'u8[262144]{0}', space=vmem, size = 0x40000, scoped, tag = 'input window, operand 4, single buffered']
    %11 = vsyncpa [#allocation3], 0
    %12 = vsyncpa [#allocation5], 0
    loop: start=0, step=1, limit=4
    $region2: #{autoencoder_forward.1} parent=1 // loop_pre_header
      _
    $region3: #{autoencoder_forward.1} parent=1 // loop_header
      %s14 = sphi 0, %s18
      %p15 = scmp.ge.s32.totalorder %s14, 4
      %s24 = sphi 0, %s26
      %s27 = sphi 0, %s24
      %s28 = sphi 0, %s27
      %s44 = sphi 0, %s28
      %s48 = sphi 0, %s48
      %s50 = sphi 0, %s48
      %s51 = sphi 0, %s50
      %s65 = sphi 0, %s51
      %s69 = sphi 0, %s69
      %s71 = sphi 0, %s69
      %s72 = sphi 0, %s71
      %s86 = sphi 0, %s72
      %s90 = sphi 0, %s90
      %s92 = sphi 0, %s90
      %s93 = sphi 0, %s92
      %s107 = sphi 0, %s93
      %s111 = sphi 0, %s111
      %s113 = sphi 0, %s111
      %s114 = sphi 0, %s113
      %s128 = sphi 0, %s114
      %s132 = sphi 0, %s132
      %s134 = sphi 0, %s132
      %s135 = sphi 0, %s134
      %s149 = sphi 0, %s135
      %s155 = sphi 0, %s157
      %s158 = sphi 0, %s155
      %s159 = sphi 0, %s158
      %s175 = sphi 0, %s159
    $region4: #{autoencoder_forward.1} parent=1 // loop_header_branch
      %17 = sbr.rel (%p15) target = $region8
    $region5: #{autoencoder_forward.1} parent=1 // loop_body
      %s19 = ssub.s32 %s14, 1
      %s20 = ssub.s32 %s14, 2
      %s21 = sadd.s32 %s14, 1
      %s22 = ssub.s32 %s14, %s21
      %p23 = scmp.eq.s32.totalorder %s22, 0
      %s25 = sadd.s32 %s24, 1
      %s26 = scalar_select %p23, %s24, %s25
      %p29 = pneg %p23
      %p30 = scmp.eq.s32.totalorder %s14, 1
      %p31 = por %p29, %p30
      %p32 = scmp.ne.s32.totalorder %s24, %s27
      %p33 = scmp.eq.s32.totalorder %s14, 0
      %p34 = por %p32, %p33
      %p35 = scmp.ne.s32.totalorder %s24, %s27
      %p36 = scmp.eq.s32.totalorder %s19, 1
      %p37 = por %p35, %p36
      %p38 = scmp.ne.s32.totalorder %s27, %s28
      %p39 = scmp.eq.s32.totalorder %s19, 0
      %p40 = por %p38, %p39
      %p41 = scmp.ne.s32.totalorder %s27, %s28
      %p42 = scmp.eq.s32.totalorder %s20, 1
      %p43 = por %p41, %p42
      %p45 = scmp.ne.s32.totalorder %s28, %s44
      %p46 = scmp.eq.s32.totalorder %s20, 0
      %p47 = por %p45, %p46
      %s49 = sadd.s32 %s48, 1
      %p52 = scmp.eq.s32.totalorder %s14, 1
      %p53 = scmp.ne.s32.totalorder %s48, %s50
      %p54 = scmp.eq.s32.totalorder %s14, 0
      %p55 = por %p53, %p54
      %p56 = scmp.ne.s32.totalorder %s48, %s50
      %p57 = scmp.eq.s32.totalorder %s19, 1
      %p58 = por %p56, %p57
      %p59 = scmp.ne.s32.totalorder %s50, %s51
      %p60 = scmp.eq.s32.totalorder %s19, 0
      %p61 = por %p59, %p60
      %p62 = scmp.ne.s32.totalorder %s50, %s51
      %p63 = scmp.eq.s32.totalorder %s20, 1
      %p64 = por %p62, %p63
      %p66 = scmp.ne.s32.totalorder %s51, %s65
      %p67 = scmp.eq.s32.totalorder %s20, 0
      %p68 = por %p66, %p67
      %s70 = sadd.s32 %s69, 1
      %p73 = scmp.eq.s32.totalorder %s14, 1
      %p74 = scmp.ne.s32.totalorder %s69, %s71
      %p75 = scmp.eq.s32.totalorder %s14, 0
      %p76 = por %p74, %p75
      %p77 = scmp.ne.s32.totalorder %s69, %s71
      %p78 = scmp.eq.s32.totalorder %s19, 1
      %p79 = por %p77, %p78
      %p80 = scmp.ne.s32.totalorder %s71, %s72
      %p81 = scmp.eq.s32.totalorder %s19, 0
      %p82 = por %p80, %p81
      %p83 = scmp.ne.s32.totalorder %s71, %s72
      %p84 = scmp.eq.s32.totalorder %s20, 1
      %p85 = por %p83, %p84
      %p87 = scmp.ne.s32.totalorder %s72, %s86
      %p88 = scmp.eq.s32.totalorder %s20, 0
      %p89 = por %p87, %p88
      %s91 = sadd.s32 %s90, 1
      %p94 = scmp.eq.s32.totalorder %s14, 1
      %p95 = scmp.ne.s32.totalorder %s90, %s92
      %p96 = scmp.eq.s32.totalorder %s14, 0
      %p97 = por %p95, %p96
      %p98 = scmp.ne.s32.totalorder %s90, %s92
      %p99 = scmp.eq.s32.totalorder %s19, 1
      %p100 = por %p98, %p99
      %p101 = scmp.ne.s32.totalorder %s92, %s93
      %p102 = scmp.eq.s32.totalorder %s19, 0
      %p103 = por %p101, %p102
      %p104 = scmp.ne.s32.totalorder %s92, %s93
      %p105 = scmp.eq.s32.totalorder %s20, 1
      %p106 = por %p104, %p105
      %p108 = scmp.ne.s32.totalorder %s93, %s107
      %p109 = scmp.eq.s32.totalorder %s20, 0
      %p110 = por %p108, %p109
      %s112 = sadd.s32 %s111, 1
      %p115 = scmp.eq.s32.totalorder %s14, 1
      %p116 = scmp.ne.s32.totalorder %s111, %s113
      %p117 = scmp.eq.s32.totalorder %s14, 0
      %p118 = por %p116, %p117
      %p119 = scmp.ne.s32.totalorder %s111, %s113
      %p120 = scmp.eq.s32.totalorder %s19, 1
      %p121 = por %p119, %p120
      %p122 = scmp.ne.s32.totalorder %s113, %s114
      %p123 = scmp.eq.s32.totalorder %s19, 0
      %p124 = por %p122, %p123
      %p125 = scmp.ne.s32.totalorder %s113, %s114
      %p126 = scmp.eq.s32.totalorder %s20, 1
      %p127 = por %p125, %p126
      %p129 = scmp.ne.s32.totalorder %s114, %s128
      %p130 = scmp.eq.s32.totalorder %s20, 0
      %p131 = por %p129, %p130
      %s133 = sadd.s32 %s132, 1
      %p136 = scmp.eq.s32.totalorder %s14, 1
      %p137 = scmp.ne.s32.totalorder %s132, %s134
      %p138 = scmp.eq.s32.totalorder %s14, 0
      %p139 = por %p137, %p138
      %p140 = scmp.ne.s32.totalorder %s132, %s134
      %p141 = scmp.eq.s32.totalorder %s19, 1
      %p142 = por %p140, %p141
      %p143 = scmp.ne.s32.totalorder %s134, %s135
      %p144 = scmp.eq.s32.totalorder %s19, 0
      %p145 = por %p143, %p144
      %p146 = scmp.ne.s32.totalorder %s134, %s135
      %p147 = scmp.eq.s32.totalorder %s20, 1
      %p148 = por %p146, %p147
      %p150 = scmp.ne.s32.totalorder %s135, %s149
      %p151 = scmp.eq.s32.totalorder %s20, 0
      %p152 = por %p150, %p151
      %s153 = ssub.s32 %s14, %s21
      %p154 = scmp.eq.s32.totalorder %s153, 0
      %s156 = sadd.s32 %s155, 1
      %s157 = scalar_select %p154, %s155, %s156
      %p160 = pneg %p154
      %p161 = scmp.eq.s32.totalorder %s14, 1
      %p162 = por %p160, %p161
      %p163 = scmp.ne.s32.totalorder %s155, %s158
      %p164 = scmp.eq.s32.totalorder %s14, 0
      %p165 = por %p163, %p164
      %p166 = scmp.ne.s32.totalorder %s155, %s158
      %p167 = scmp.eq.s32.totalorder %s19, 1
      %p168 = por %p166, %p167
      %p169 = scmp.ne.s32.totalorder %s158, %s159
      %p170 = scmp.eq.s32.totalorder %s19, 0
      %p171 = por %p169, %p170
      %p172 = scmp.ne.s32.totalorder %s158, %s159
      %p173 = scmp.eq.s32.totalorder %s20, 1
      %p174 = por %p172, %p173
      %p176 = scmp.ne.s32.totalorder %s159, %s175
      %p177 = scmp.eq.s32.totalorder %s20, 0
      %p178 = por %p176, %p177
      %p179 = scmp.le.s32.totalorder 1, %s14
      %p180 = scmp.lt.s32.totalorder %s14, 3
      %p181 = pnand %p179, %p180
      %p182 = pneg %p181
      // Predicated region
      $region9: #{autoencoder_forward.1} parent=5 // pred_check
        _
      $region10: #{autoencoder_forward.1} parent=5 // pred_check_branch
        %184 = sbr.rel (%p181) target = $region12
      $region11: #{autoencoder_forward.1} parent=5 // pred_region
        %s185 = ssub.s32 %s14, 1
        // Predicated region
        $region13: #{autoencoder_forward.1} parent=11 // pred_check
          %p186 = pneg %p61
        $region14: #{autoencoder_forward.1} parent=11 // pred_check_branch
          %188 = sbr.rel (%p186) target = $region16
        $region15: #{autoencoder_forward.1} parent=11 // pred_region
          %s190 = ssub.s32 8192, 8192
          %191 = vsyncadd [#allocation3], %s190
          %s192 = sshll.u32 [#allocation2], 4
          %s193 = int_to_ptr.vmem [resolvable:$true] %s192
          %198 = dma.hbm_to_vmem [thread:$0]  %s1, 8192, %s193, [#allocation3], 64, 64, 4
        $region16: #{autoencoder_forward.1} parent=11 // pred_fallthru
          _
        // Predicated region
        $region17: #{autoencoder_forward.1} parent=11 // pred_check
          %p199 = pneg %p82
        $region18: #{autoencoder_forward.1} parent=11 // pred_check_branch
          %201 = sbr.rel (%p199) target = $region20
        $region19: #{autoencoder_forward.1} parent=11 // pred_region
          %s203 = ssub.s32 8192, 8192
          %204 = vsyncadd [#allocation5], %s203
          %s205 = sshll.u32 [#allocation4], 4
          %s206 = int_to_ptr.vmem [resolvable:$true] %s205
          %211 = dma.hbm_to_vmem [thread:$0]  %s2, 8192, %s206, [#allocation5], 64, 64, 4
        $region20: #{autoencoder_forward.1} parent=11 // pred_fallthru
          _
        // Predicated region
        $region21: #{autoencoder_forward.1} parent=11 // pred_check
          %p212 = pneg %p103
        $region22: #{autoencoder_forward.1} parent=11 // pred_check_branch
          %214 = sbr.rel (%p212) target = $region24
        $region23: #{autoencoder_forward.1} parent=11 // pred_region
          _
        $region24: #{autoencoder_forward.1} parent=11 // pred_fallthru
          _
        // Predicated region
        $region25: #{autoencoder_forward.1} parent=11 // pred_check
          %p215 = pneg %p124
        $region26: #{autoencoder_forward.1} parent=11 // pred_check_branch
          %217 = sbr.rel (%p215) target = $region28
        $region27: #{autoencoder_forward.1} parent=11 // pred_region
          %s219 = ssub.s32 8192, 8192
          %220 = vsyncadd [#allocation5], %s219
          %s221 = sshll.u32 [#allocation6], 4
          %s222 = int_to_ptr.vmem [resolvable:$true] %s221
          %227 = dma.hbm_to_vmem [thread:$0]  %s4, 8192, %s222, [#allocation5], 512, 512, 32
        $region28: #{autoencoder_forward.1} parent=11 // pred_fallthru
          _
        // Predicated region
        $region29: #{autoencoder_forward.1} parent=11 // pred_check
          %p228 = pneg %p145
        $region30: #{autoencoder_forward.1} parent=11 // pred_check_branch
          %230 = sbr.rel (%p228) target = $region32
        $region31: #{autoencoder_forward.1} parent=11 // pred_region
          _
        $region32: #{autoencoder_forward.1} parent=11 // pred_fallthru
          _
      $region12: #{autoencoder_forward.1} parent=5 // pred_fallthru
        _
      %p231 = scmp.lt.s32.totalorder %s14, 2
      // Predicated region
      $region33: #{autoencoder_forward.1} parent=5 // pred_check
        %p232 = pneg %p231
      $region34: #{autoencoder_forward.1} parent=5 // pred_check_branch
        %234 = sbr.rel (%p232) target = $region36
      $region35: #{autoencoder_forward.1} parent=5 // pred_region
        // Predicated region
        $region37: #{autoencoder_forward.1} parent=35 // pred_check
          %p235 = pneg %p34
        $region38: #{autoencoder_forward.1} parent=35 // pred_check_branch
          %237 = sbr.rel (%p235) target = $region40
        $region39: #{autoencoder_forward.1} parent=35 // pred_region
          %p238 = scmp.lt.s32.totalorder %s14, 1
          %s239 = scalar_select %p238, %s14, 1
          %s240 = smul.addr %s239, 8
          %s241 = smul.addr %s240, 8
          %s242 = scalar_lea.vmem %s0, %s241
        $region40: #{autoencoder_forward.1} parent=35 // pred_fallthru
          _
      $region36: #{autoencoder_forward.1} parent=5 // pred_fallthru
        _
      %p243 = scmp.le.s32.totalorder 1, %s14
      %p244 = scmp.lt.s32.totalorder %s14, 3
      %p245 = pnand %p243, %p244
      %p246 = pneg %p245
      // Predicated region
      $region41: #{autoencoder_forward.1} parent=5 // pred_check
        _
      $region42: #{autoencoder_forward.1} parent=5 // pred_check_branch
        %248 = sbr.rel (%p245) target = $region44
      $region43: #{autoencoder_forward.1} parent=5 // pred_region
        %s249 = ssub.s32 %s14, 1
        // Predicated region
        $region45: #{autoencoder_forward.1} parent=43 // pred_check
          %p250 = pneg %p61
        $region46: #{autoencoder_forward.1} parent=43 // pred_check_branch
          %252 = sbr.rel (%p250) target = $region48
        $region47: #{autoencoder_forward.1} parent=43 // pred_region
          %253 = dma.done [#allocation3], 8192
        $region48: #{autoencoder_forward.1} parent=43 // pred_fallthru
          _
        // Predicated region
        $region49: #{autoencoder_forward.1} parent=43 // pred_check
          %p254 = pneg %p82
        $region50: #{autoencoder_forward.1} parent=43 // pred_check_branch
          %256 = sbr.rel (%p254) target = $region52
        $region51: #{autoencoder_forward.1} parent=43 // pred_region
          %257 = dma.done [#allocation5], 8192
        $region52: #{autoencoder_forward.1} parent=43 // pred_fallthru
          _
        // Predicated region
        $region53: #{autoencoder_forward.1} parent=43 // pred_check
          %p258 = pneg %p124
        $region54: #{autoencoder_forward.1} parent=43 // pred_check_branch
          %260 = sbr.rel (%p258) target = $region56
        $region55: #{autoencoder_forward.1} parent=43 // pred_region
          %261 = dma.done [#allocation5], 8192
        $region56: #{autoencoder_forward.1} parent=43 // pred_fallthru
          _
        %p262 = scmp.lt.s32.totalorder %s19, 1
        %s263 = scalar_select %p262, %s19, 1
        %s264 = smul.addr %s263, 8
        %s265 = smul.addr %s264, 8
        %s266 = scalar_lea.vmem %s0, %s265
        %p267 = pneg %p40
        %p268 = pneg %p37
        %p269 = pneg %p61
        %p270 = pneg %p58
        %p271 = pneg %p82
        %p272 = pneg %p79
        %p273 = pneg %p103
        %p274 = pneg %p100
        %p275 = pneg %p124
        %p276 = pneg %p121
        %p277 = pneg %p145
        %p278 = pneg %p142
        %p279 = pneg %p171
        %p280 = pneg %p168
        %p281 = scmp.lt.s32.totalorder %s19, 1
        %s282 = scalar_select %p281, %s19, 1
        %s283 = smul.addr %s282, 8
        %s284 = smul.addr %s283, 8
        %s285 = scalar_lea.vmem %s6, %s284
        %p286 = scmp.lt.s32.totalorder %s19, 1
        %s287 = scalar_select %p286, %s19, 1
        %s288 = smul.addr %s287, 8
        %s289 = smul.addr %s288, 8
        %s290 = scalar_lea.vmem %s0, %s289
        %p291 = scmp.lt.s32.totalorder %s19, 1
        %s292 = scalar_select %p291, %s19, 1
        %s293 = smul.addr %s292, 8
        %s294 = smul.addr %s293, 8
        %s295 = scalar_lea.vmem %s6, %s294
        %v297 = vld [vmem:[%s290] sm:$0xff]
        %v298 = vld [vmem:[%s290 + $0x8] sm:$0xff]
        %v299 = vld [vmem:[%s290 + $0x10] sm:$0xff]
        %v300 = vld [vmem:[%s290 + $0x18] sm:$0xff]
        %v301 = vld [vmem:[%s290 + $0x20] sm:$0xff]
        %v302 = vld [vmem:[%s290 + $0x28] sm:$0xff]
        %v303 = vld [vmem:[%s290 + $0x30] sm:$0xff]
        %v304 = vld [vmem:[%s290 + $0x38] sm:$0xff]
        %v305 = vpack.c.bf16 %v297, %v297
        %v306 = vpack.c.bf16 %v298, %v298
        %v307 = vpack.c.bf16 %v299, %v299
        %v308 = vpack.c.bf16 %v300, %v300
        %v309 = vpack.c.bf16 %v301, %v301
        %v310 = vpack.c.bf16 %v302, %v302
        %v311 = vpack.c.bf16 %v303, %v303
        %v312 = vpack.c.bf16 %v304, %v304
        %v313 = vld [vmem:[#allocation2] sm:$0xf]
        %v314 = vld [vmem:[#allocation2 + $0x4] sm:$0xf]
        %v315 = vld [vmem:[#allocation2 + $0x8] sm:$0xf]
        %v316 = vld [vmem:[#allocation2 + $0xc] sm:$0xf]
        %v317 = vld [vmem:[#allocation2 + $0x10] sm:$0xf]
        %v318 = vld [vmem:[#allocation2 + $0x14] sm:$0xf]
        %v319 = vld [vmem:[#allocation2 + $0x18] sm:$0xf]
        %v320 = vld [vmem:[#allocation2 + $0x1c] sm:$0xf]
        %v321 = vld [vmem:[#allocation2 + $0x20] sm:$0xf]
        %v322 = vld [vmem:[#allocation2 + $0x24] sm:$0xf]
        %v323 = vld [vmem:[#allocation2 + $0x28] sm:$0xf]
        %v324 = vld [vmem:[#allocation2 + $0x2c] sm:$0xf]
        %v325 = vld [vmem:[#allocation2 + $0x30] sm:$0xf]
        %v326 = vld [vmem:[#allocation2 + $0x34] sm:$0xf]
        %v327 = vld [vmem:[#allocation2 + $0x38] sm:$0xf]
        %v328 = vld [vmem:[#allocation2 + $0x3c] sm:$0xf]
        %v329 = vld [vmem:[#allocation2 + $0x40] sm:$0xf]
        %v330 = vld [vmem:[#allocation2 + $0x44] sm:$0xf]
        %v331 = vld [vmem:[#allocation2 + $0x48] sm:$0xf]
        %v332 = vld [vmem:[#allocation2 + $0x4c] sm:$0xf]
        %v333 = vld [vmem:[#allocation2 + $0x50] sm:$0xf]
        %v334 = vld [vmem:[#allocation2 + $0x54] sm:$0xf]
        %v335 = vld [vmem:[#allocation2 + $0x58] sm:$0xf]
        %v336 = vld [vmem:[#allocation2 + $0x5c] sm:$0xf]
        %v337 = vld [vmem:[#allocation2 + $0x60] sm:$0xf]
        %v338 = vld [vmem:[#allocation2 + $0x64] sm:$0xf]
        %v339 = vld [vmem:[#allocation2 + $0x68] sm:$0xf]
        %v340 = vld [vmem:[#allocation2 + $0x6c] sm:$0xf]
        %v341 = vld [vmem:[#allocation2 + $0x70] sm:$0xf]
        %v342 = vld [vmem:[#allocation2 + $0x74] sm:$0xf]
        %v343 = vld [vmem:[#allocation2 + $0x78] sm:$0xf]
        %v344 = vld [vmem:[#allocation2 + $0x7c] sm:$0xf]
        %v345 = vld [vmem:[#allocation2 + $0x80] sm:$0xf]
        %v346 = vld [vmem:[#allocation2 + $0x84] sm:$0xf]
        %v347 = vld [vmem:[#allocation2 + $0x88] sm:$0xf]
        %v348 = vld [vmem:[#allocation2 + $0x8c] sm:$0xf]
        %v349 = vld [vmem:[#allocation2 + $0x90] sm:$0xf]
        %v350 = vld [vmem:[#allocation2 + $0x94] sm:$0xf]
        %v351 = vld [vmem:[#allocation2 + $0x98] sm:$0xf]
        %v352 = vld [vmem:[#allocation2 + $0x9c] sm:$0xf]
        %v353 = vld [vmem:[#allocation2 + $0xa0] sm:$0xf]
        %v354 = vld [vmem:[#allocation2 + $0xa4] sm:$0xf]
        %v355 = vld [vmem:[#allocation2 + $0xa8] sm:$0xf]
        %v356 = vld [vmem:[#allocation2 + $0xac] sm:$0xf]
        %v357 = vld [vmem:[#allocation2 + $0xb0] sm:$0xf]
        %v358 = vld [vmem:[#allocation2 + $0xb4] sm:$0xf]
        %v359 = vld [vmem:[#allocation2 + $0xb8] sm:$0xf]
        %v360 = vld [vmem:[#allocation2 + $0xbc] sm:$0xf]
        %v361 = vld [vmem:[#allocation2 + $0xc0] sm:$0xf]
        %v362 = vld [vmem:[#allocation2 + $0xc4] sm:$0xf]
        %v363 = vld [vmem:[#allocation2 + $0xc8] sm:$0xf]
        %v364 = vld [vmem:[#allocation2 + $0xcc] sm:$0xf]
        %v365 = vld [vmem:[#allocation2 + $0xd0] sm:$0xf]
        %v366 = vld [vmem:[#allocation2 + $0xd4] sm:$0xf]
        %v367 = vld [vmem:[#allocation2 + $0xd8] sm:$0xf]
        %v368 = vld [vmem:[#allocation2 + $0xdc] sm:$0xf]
        %v369 = vld [vmem:[#allocation2 + $0xe0] sm:$0xf]
        %v370 = vld [vmem:[#allocation2 + $0xe4] sm:$0xf]
        %v371 = vld [vmem:[#allocation2 + $0xe8] sm:$0xf]
        %v372 = vld [vmem:[#allocation2 + $0xec] sm:$0xf]
        %v373 = vld [vmem:[#allocation2 + $0xf0] sm:$0xf]
        %v374 = vld [vmem:[#allocation2 + $0xf4] sm:$0xf]
        %v375 = vld [vmem:[#allocation2 + $0xf8] sm:$0xf]
        %v376 = vld [vmem:[#allocation2 + $0xfc] sm:$0xf]
        %v377 = vld [vmem:[#allocation2 + $0x100] sm:$0xf]
        %v378 = vld [vmem:[#allocation2 + $0x104] sm:$0xf]
        %v379 = vld [vmem:[#allocation2 + $0x108] sm:$0xf]
        %v380 = vld [vmem:[#allocation2 + $0x10c] sm:$0xf]
        %v381 = vld [vmem:[#allocation2 + $0x110] sm:$0xf]
        %v382 = vld [vmem:[#allocation2 + $0x114] sm:$0xf]
        %v383 = vld [vmem:[#allocation2 + $0x118] sm:$0xf]
        %v384 = vld [vmem:[#allocation2 + $0x11c] sm:$0xf]
        %v385 = vld [vmem:[#allocation2 + $0x120] sm:$0xf]
        %v386 = vld [vmem:[#allocation2 + $0x124] sm:$0xf]
        %v387 = vld [vmem:[#allocation2 + $0x128] sm:$0xf]
        %v388 = vld [vmem:[#allocation2 + $0x12c] sm:$0xf]
        %v389 = vld [vmem:[#allocation2 + $0x130] sm:$0xf]
        %v390 = vld [vmem:[#allocation2 + $0x134] sm:$0xf]
        %v391 = vld [vmem:[#allocation2 + $0x138] sm:$0xf]
        %v392 = vld [vmem:[#allocation2 + $0x13c] sm:$0xf]
        %v393 = vld [vmem:[#allocation2 + $0x140] sm:$0xf]
        %v394 = vld [vmem:[#allocation2 + $0x144] sm:$0xf]
        %v395 = vld [vmem:[#allocation2 + $0x148] sm:$0xf]
        %v396 = vld [vmem:[#allocation2 + $0x14c] sm:$0xf]
        %v397 = vld [vmem:[#allocation2 + $0x150] sm:$0xf]
        %v398 = vld [vmem:[#allocation2 + $0x154] sm:$0xf]
        %v399 = vld [vmem:[#allocation2 + $0x158] sm:$0xf]
        %v400 = vld [vmem:[#allocation2 + $0x15c] sm:$0xf]
        %v401 = vld [vmem:[#allocation2 + $0x160] sm:$0xf]
        %v402 = vld [vmem:[#allocation2 + $0x164] sm:$0xf]
        %v403 = vld [vmem:[#allocation2 + $0x168] sm:$0xf]
        %v404 = vld [vmem:[#allocation2 + $0x16c] sm:$0xf]
        %v405 = vld [vmem:[#allocation2 + $0x170] sm:$0xf]
        %v406 = vld [vmem:[#allocation2 + $0x174] sm:$0xf]
        %v407 = vld [vmem:[#allocation2 + $0x178] sm:$0xf]
        %v408 = vld [vmem:[#allocation2 + $0x17c] sm:$0xf]
        %v409 = vld [vmem:[#allocation2 + $0x180] sm:$0xf]
        %v410 = vld [vmem:[#allocation2 + $0x184] sm:$0xf]
        %v411 = vld [vmem:[#allocation2 + $0x188] sm:$0xf]
        %v412 = vld [vmem:[#allocation2 + $0x18c] sm:$0xf]
        %v413 = vld [vmem:[#allocation2 + $0x190] sm:$0xf]
        %v414 = vld [vmem:[#allocation2 + $0x194] sm:$0xf]
        %v415 = vld [vmem:[#allocation2 + $0x198] sm:$0xf]
        %v416 = vld [vmem:[#allocation2 + $0x19c] sm:$0xf]
        %v417 = vld [vmem:[#allocation2 + $0x1a0] sm:$0xf]
        %v418 = vld [vmem:[#allocation2 + $0x1a4] sm:$0xf]
        %v419 = vld [vmem:[#allocation2 + $0x1a8] sm:$0xf]
        %v420 = vld [vmem:[#allocation2 + $0x1ac] sm:$0xf]
        %v421 = vld [vmem:[#allocation2 + $0x1b0] sm:$0xf]
        %v422 = vld [vmem:[#allocation2 + $0x1b4] sm:$0xf]
        %v423 = vld [vmem:[#allocation2 + $0x1b8] sm:$0xf]
        %v424 = vld [vmem:[#allocation2 + $0x1bc] sm:$0xf]
        %v425 = vld [vmem:[#allocation2 + $0x1c0] sm:$0xf]
        %v426 = vld [vmem:[#allocation2 + $0x1c4] sm:$0xf]
        %v427 = vld [vmem:[#allocation2 + $0x1c8] sm:$0xf]
        %v428 = vld [vmem:[#allocation2 + $0x1cc] sm:$0xf]
        %v429 = vld [vmem:[#allocation2 + $0x1d0] sm:$0xf]
        %v430 = vld [vmem:[#allocation2 + $0x1d4] sm:$0xf]
        %v431 = vld [vmem:[#allocation2 + $0x1d8] sm:$0xf]
        %v432 = vld [vmem:[#allocation2 + $0x1dc] sm:$0xf]
        %v433 = vld [vmem:[#allocation2 + $0x1e0] sm:$0xf]
        %v434 = vld [vmem:[#allocation2 + $0x1e4] sm:$0xf]
        %v435 = vld [vmem:[#allocation2 + $0x1e8] sm:$0xf]
        %v436 = vld [vmem:[#allocation2 + $0x1ec] sm:$0xf]
        %v437 = vld [vmem:[#allocation2 + $0x1f0] sm:$0xf]
        %v438 = vld [vmem:[#allocation2 + $0x1f4] sm:$0xf]
        %v439 = vld [vmem:[#allocation2 + $0x1f8] sm:$0xf]
        %v440 = vld [vmem:[#allocation2 + $0x1fc] sm:$0xf]
        %v569 = vunpack.c.l.b16 %v313
        %v570 = vunpack.c.l.b16 %v314
        %v571 = vunpack.c.l.b16 %v315
        %v572 = vunpack.c.l.b16 %v316
        %v573 = vunpack.c.l.b16 %v317
        %v574 = vunpack.c.l.b16 %v318
        %v575 = vunpack.c.l.b16 %v319
        %v576 = vunpack.c.l.b16 %v320
        %v577 = vunpack.c.l.b16 %v321
        %v578 = vunpack.c.l.b16 %v322
        %v579 = vunpack.c.l.b16 %v323
        %v580 = vunpack.c.l.b16 %v324
        %v581 = vunpack.c.l.b16 %v325
        %v582 = vunpack.c.l.b16 %v326
        %v583 = vunpack.c.l.b16 %v327
        %v584 = vunpack.c.l.b16 %v328
        %v585 = vunpack.c.l.b16 %v329
        %v586 = vunpack.c.l.b16 %v330
        %v587 = vunpack.c.l.b16 %v331
        %v588 = vunpack.c.l.b16 %v332
        %v589 = vunpack.c.l.b16 %v333
        %v590 = vunpack.c.l.b16 %v334
        %v591 = vunpack.c.l.b16 %v335
        %v592 = vunpack.c.l.b16 %v336
        %v593 = vunpack.c.l.b16 %v337
        %v594 = vunpack.c.l.b16 %v338
        %v595 = vunpack.c.l.b16 %v339
        %v596 = vunpack.c.l.b16 %v340
        %v597 = vunpack.c.l.b16 %v341
        %v598 = vunpack.c.l.b16 %v342
        %v599 = vunpack.c.l.b16 %v343
        %v600 = vunpack.c.l.b16 %v344
        %v601 = vunpack.c.l.b16 %v345
        %v602 = vunpack.c.l.b16 %v346
        %v603 = vunpack.c.l.b16 %v347
        %v604 = vunpack.c.l.b16 %v348
        %v605 = vunpack.c.l.b16 %v349
        %v606 = vunpack.c.l.b16 %v350
        %v607 = vunpack.c.l.b16 %v351
        %v608 = vunpack.c.l.b16 %v352
        %v609 = vunpack.c.l.b16 %v353
        %v610 = vunpack.c.l.b16 %v354
        %v611 = vunpack.c.l.b16 %v355
        %v612 = vunpack.c.l.b16 %v356
        %v613 = vunpack.c.l.b16 %v357
        %v614 = vunpack.c.l.b16 %v358
        %v615 = vunpack.c.l.b16 %v359
        %v616 = vunpack.c.l.b16 %v360
        %v617 = vunpack.c.l.b16 %v361
        %v618 = vunpack.c.l.b16 %v362
        %v619 = vunpack.c.l.b16 %v363
        %v620 = vunpack.c.l.b16 %v364
        %v621 = vunpack.c.l.b16 %v365
        %v622 = vunpack.c.l.b16 %v366
        %v623 = vunpack.c.l.b16 %v367
        %v624 = vunpack.c.l.b16 %v368
        %v625 = vunpack.c.l.b16 %v369
        %v626 = vunpack.c.l.b16 %v370
        %v627 = vunpack.c.l.b16 %v371
        %v628 = vunpack.c.l.b16 %v372
        %v629 = vunpack.c.l.b16 %v373
        %v630 = vunpack.c.l.b16 %v374
        %v631 = vunpack.c.l.b16 %v375
        %v632 = vunpack.c.l.b16 %v376
        %v633 = vunpack.c.l.b16 %v377
        %v634 = vunpack.c.l.b16 %v378
        %v635 = vunpack.c.l.b16 %v379
        %v636 = vunpack.c.l.b16 %v380
        %v637 = vunpack.c.l.b16 %v381
        %v638 = vunpack.c.l.b16 %v382
        %v639 = vunpack.c.l.b16 %v383
        %v640 = vunpack.c.l.b16 %v384
        %v641 = vunpack.c.l.b16 %v385
        %v642 = vunpack.c.l.b16 %v386
        %v643 = vunpack.c.l.b16 %v387
        %v644 = vunpack.c.l.b16 %v388
        %v645 = vunpack.c.l.b16 %v389
        %v646 = vunpack.c.l.b16 %v390
        %v647 = vunpack.c.l.b16 %v391
        %v648 = vunpack.c.l.b16 %v392
        %v649 = vunpack.c.l.b16 %v393
        %v650 = vunpack.c.l.b16 %v394
        %v651 = vunpack.c.l.b16 %v395
        %v652 = vunpack.c.l.b16 %v396
        %v653 = vunpack.c.l.b16 %v397
        %v654 = vunpack.c.l.b16 %v398
        %v655 = vunpack.c.l.b16 %v399
        %v656 = vunpack.c.l.b16 %v400
        %v657 = vunpack.c.l.b16 %v401
        %v658 = vunpack.c.l.b16 %v402
        %v659 = vunpack.c.l.b16 %v403
        %v660 = vunpack.c.l.b16 %v404
        %v661 = vunpack.c.l.b16 %v405
        %v662 = vunpack.c.l.b16 %v406
        %v663 = vunpack.c.l.b16 %v407
        %v664 = vunpack.c.l.b16 %v408
        %v665 = vunpack.c.l.b16 %v409
        %v666 = vunpack.c.l.b16 %v410
        %v667 = vunpack.c.l.b16 %v411
        %v668 = vunpack.c.l.b16 %v412
        %v669 = vunpack.c.l.b16 %v413
        %v670 = vunpack.c.l.b16 %v414
        %v671 = vunpack.c.l.b16 %v415
        %v672 = vunpack.c.l.b16 %v416
        %v673 = vunpack.c.l.b16 %v417
        %v674 = vunpack.c.l.b16 %v418
        %v675 = vunpack.c.l.b16 %v419
        %v676 = vunpack.c.l.b16 %v420
        %v677 = vunpack.c.l.b16 %v421
        %v678 = vunpack.c.l.b16 %v422
        %v679 = vunpack.c.l.b16 %v423
        %v680 = vunpack.c.l.b16 %v424
        %v681 = vunpack.c.l.b16 %v425
        %v682 = vunpack.c.l.b16 %v426
        %v683 = vunpack.c.l.b16 %v427
        %v684 = vunpack.c.l.b16 %v428
        %v685 = vunpack.c.l.b16 %v429
        %v686 = vunpack.c.l.b16 %v430
        %v687 = vunpack.c.l.b16 %v431
        %v688 = vunpack.c.l.b16 %v432
        %v689 = vunpack.c.l.b16 %v433
        %v690 = vunpack.c.l.b16 %v434
        %v691 = vunpack.c.l.b16 %v435
        %v692 = vunpack.c.l.b16 %v436
        %v693 = vunpack.c.l.b16 %v437
        %v694 = vunpack.c.l.b16 %v438
        %v695 = vunpack.c.l.b16 %v439
        %v696 = vunpack.c.l.b16 %v440
        %v697 = vpack.c.b16 %v570, %v569
        %v698 = vpack.c.b16 %v572, %v571
        %v699 = vpack.c.b16 %v574, %v573
        %v700 = vpack.c.b16 %v576, %v575
        %v701 = vpack.c.b16 %v578, %v577
        %v702 = vpack.c.b16 %v580, %v579
        %v703 = vpack.c.b16 %v582, %v581
        %v704 = vpack.c.b16 %v584, %v583
        %v705 = vpack.c.b16 %v586, %v585
        %v706 = vpack.c.b16 %v588, %v587
        %v707 = vpack.c.b16 %v590, %v589
        %v708 = vpack.c.b16 %v592, %v591
        %v709 = vpack.c.b16 %v594, %v593
        %v710 = vpack.c.b16 %v596, %v595
        %v711 = vpack.c.b16 %v598, %v597
        %v712 = vpack.c.b16 %v600, %v599
        %v713 = vpack.c.b16 %v602, %v601
        %v714 = vpack.c.b16 %v604, %v603
        %v715 = vpack.c.b16 %v606, %v605
        %v716 = vpack.c.b16 %v608, %v607
        %v717 = vpack.c.b16 %v610, %v609
        %v718 = vpack.c.b16 %v612, %v611
        %v719 = vpack.c.b16 %v614, %v613
        %v720 = vpack.c.b16 %v616, %v615
        %v721 = vpack.c.b16 %v618, %v617
        %v722 = vpack.c.b16 %v620, %v619
        %v723 = vpack.c.b16 %v622, %v621
        %v724 = vpack.c.b16 %v624, %v623
        %v725 = vpack.c.b16 %v626, %v625
        %v726 = vpack.c.b16 %v628, %v627
        %v727 = vpack.c.b16 %v630, %v629
        %v728 = vpack.c.b16 %v632, %v631
        %v729 = vpack.c.b16 %v634, %v633
        %v730 = vpack.c.b16 %v636, %v635
        %v731 = vpack.c.b16 %v638, %v637
        %v732 = vpack.c.b16 %v640, %v639
        %v733 = vpack.c.b16 %v642, %v641
        %v734 = vpack.c.b16 %v644, %v643
        %v735 = vpack.c.b16 %v646, %v645
        %v736 = vpack.c.b16 %v648, %v647
        %v737 = vpack.c.b16 %v650, %v649
        %v738 = vpack.c.b16 %v652, %v651
        %v739 = vpack.c.b16 %v654, %v653
        %v740 = vpack.c.b16 %v656, %v655
        %v741 = vpack.c.b16 %v658, %v657
        %v742 = vpack.c.b16 %v660, %v659
        %v743 = vpack.c.b16 %v662, %v661
        %v744 = vpack.c.b16 %v664, %v663
        %v745 = vpack.c.b16 %v666, %v665
        %v746 = vpack.c.b16 %v668, %v667
        %v747 = vpack.c.b16 %v670, %v669
        %v748 = vpack.c.b16 %v672, %v671
        %v749 = vpack.c.b16 %v674, %v673
        %v750 = vpack.c.b16 %v676, %v675
        %v751 = vpack.c.b16 %v678, %v677
        %v752 = vpack.c.b16 %v680, %v679
        %v753 = vpack.c.b16 %v682, %v681
        %v754 = vpack.c.b16 %v684, %v683
        %v755 = vpack.c.b16 %v686, %v685
        %v756 = vpack.c.b16 %v688, %v687
        %v757 = vpack.c.b16 %v690, %v689
        %v758 = vpack.c.b16 %v692, %v691
        %v759 = vpack.c.b16 %v694, %v693
        %v760 = vpack.c.b16 %v696, %v695
        %825 = vmatprep.subr.bf16.mxu0 0
        %826 = vmatpush1.bf16.msra.mxu0 %v697
        %827 = vmatprep.subr.bf16.mxu0 0
        %828 = vmatpush1.bf16.msra.mxu0 %v698
        %829 = vmatprep.subr.bf16.mxu0 0
        %830 = vmatpush1.bf16.msra.mxu0 %v699
        %831 = vmatprep.subr.bf16.mxu0 0
        %832 = vmatpush1.bf16.msra.mxu0 %v700
        %833 = vmatprep.subr.bf16.mxu0 0
        %834 = vmatpush1.bf16.msra.mxu0 %v701
        %835 = vmatprep.subr.bf16.mxu0 0
        %836 = vmatpush1.bf16.msra.mxu0 %v702
        %837 = vmatprep.subr.bf16.mxu0 0
        %838 = vmatpush1.bf16.msra.mxu0 %v703
        %839 = vmatprep.subr.bf16.mxu0 0
        %840 = vmatpush1.bf16.msra.mxu0 %v704
        %841 = vmatprep.subr.bf16.mxu0 0
        %842 = vmatpush1.bf16.msra.mxu0 %v705
        %843 = vmatprep.subr.bf16.mxu0 0
        %844 = vmatpush1.bf16.msra.mxu0 %v706
        %845 = vmatprep.subr.bf16.mxu0 0
        %846 = vmatpush1.bf16.msra.mxu0 %v707
        %847 = vmatprep.subr.bf16.mxu0 0
        %848 = vmatpush1.bf16.msra.mxu0 %v708
        %849 = vmatprep.subr.bf16.mxu0 0
        %850 = vmatpush1.bf16.msra.mxu0 %v709
        %851 = vmatprep.subr.bf16.mxu0 0
        %852 = vmatpush1.bf16.msra.mxu0 %v710
        %853 = vmatprep.subr.bf16.mxu0 0
        %854 = vmatpush1.bf16.msra.mxu0 %v711
        %855 = vmatprep.subr.bf16.mxu0 0
        %856 = vmatpush1.bf16.msra.mxu0 %v712
        %857 = vmatprep.mubr.bf16.mxu0 %v306
        %858 = vmatmul.mubr.bf16.gmra.mrb[0].mxu0 %v305
        %v859 = vpop.f32.mrb[0].mxu0
        %v860 = vadd.f32 0.0, %v859
        %v861 = vpop.f32.mrb[0].mxu0
        %v862 = vpop.f32.mrb[0].mxu0
        %v863 = vpop.f32.mrb[0].mxu0
        %864 = vdwg.mxu0
        %865 = vmatprep.subr.bf16.mxu0 0
        %866 = vmatpush1.bf16.msra.mxu0 %v713
        %867 = vmatprep.subr.bf16.mxu0 0
        %868 = vmatpush1.bf16.msra.mxu0 %v714
        %869 = vmatprep.subr.bf16.mxu0 0
        %870 = vmatpush1.bf16.msra.mxu0 %v715
        %871 = vmatprep.subr.bf16.mxu0 0
        %872 = vmatpush1.bf16.msra.mxu0 %v716
        %873 = vmatprep.subr.bf16.mxu0 0
        %874 = vmatpush1.bf16.msra.mxu0 %v717
        %875 = vmatprep.subr.bf16.mxu0 0
        %876 = vmatpush1.bf16.msra.mxu0 %v718
        %877 = vmatprep.subr.bf16.mxu0 0
        %878 = vmatpush1.bf16.msra.mxu0 %v719
        %879 = vmatprep.subr.bf16.mxu0 0
        %880 = vmatpush1.bf16.msra.mxu0 %v720
        %881 = vmatprep.subr.bf16.mxu0 0
        %882 = vmatpush1.bf16.msra.mxu0 %v721
        %883 = vmatprep.subr.bf16.mxu0 0
        %884 = vmatpush1.bf16.msra.mxu0 %v722
        %885 = vmatprep.subr.bf16.mxu0 0
        %886 = vmatpush1.bf16.msra.mxu0 %v723
        %887 = vmatprep.subr.bf16.mxu0 0
        %888 = vmatpush1.bf16.msra.mxu0 %v724
        %889 = vmatprep.subr.bf16.mxu0 0
        %890 = vmatpush1.bf16.msra.mxu0 %v725
        %891 = vmatprep.subr.bf16.mxu0 0
        %892 = vmatpush1.bf16.msra.mxu0 %v726
        %893 = vmatprep.subr.bf16.mxu0 0
        %894 = vmatpush1.bf16.msra.mxu0 %v727
        %895 = vmatprep.subr.bf16.mxu0 0
        %896 = vmatpush1.bf16.msra.mxu0 %v728
        %897 = vmatprep.mubr.bf16.mxu0 %v308
        %898 = vmatmul.mubr.bf16.gmra.mrb[0].mxu0 %v307
        %v899 = vpop.f32.mrb[0].mxu0
        %v900 = vadd.f32 %v860, %v899
        %v901 = vpop.f32.mrb[0].mxu0
        %v902 = vpop.f32.mrb[0].mxu0
        %v903 = vpop.f32.mrb[0].mxu0
        %904 = vdwg.mxu0
        %905 = vmatprep.subr.bf16.mxu0 0
        %906 = vmatpush1.bf16.msra.mxu0 %v729
        %907 = vmatprep.subr.bf16.mxu0 0
        %908 = vmatpush1.bf16.msra.mxu0 %v730
        %909 = vmatprep.subr.bf16.mxu0 0
        %910 = vmatpush1.bf16.msra.mxu0 %v731
        %911 = vmatprep.subr.bf16.mxu0 0
        %912 = vmatpush1.bf16.msra.mxu0 %v732
        %913 = vmatprep.subr.bf16.mxu0 0
        %914 = vmatpush1.bf16.msra.mxu0 %v733
        %915 = vmatprep.subr.bf16.mxu0 0
        %916 = vmatpush1.bf16.msra.mxu0 %v734
        %917 = vmatprep.subr.bf16.mxu0 0
        %918 = vmatpush1.bf16.msra.mxu0 %v735
        %919 = vmatprep.subr.bf16.mxu0 0
        %920 = vmatpush1.bf16.msra.mxu0 %v736
        %921 = vmatprep.subr.bf16.mxu0 0
        %922 = vmatpush1.bf16.msra.mxu0 %v737
        %923 = vmatprep.subr.bf16.mxu0 0
        %924 = vmatpush1.bf16.msra.mxu0 %v738
        %925 = vmatprep.subr.bf16.mxu0 0
        %926 = vmatpush1.bf16.msra.mxu0 %v739
        %927 = vmatprep.subr.bf16.mxu0 0
        %928 = vmatpush1.bf16.msra.mxu0 %v740
        %929 = vmatprep.subr.bf16.mxu0 0
        %930 = vmatpush1.bf16.msra.mxu0 %v741
        %931 = vmatprep.subr.bf16.mxu0 0
        %932 = vmatpush1.bf16.msra.mxu0 %v742
        %933 = vmatprep.subr.bf16.mxu0 0
        %934 = vmatpush1.bf16.msra.mxu0 %v743
        %935 = vmatprep.subr.bf16.mxu0 0
        %936 = vmatpush1.bf16.msra.mxu0 %v744
        %937 = vmatprep.mubr.bf16.mxu0 %v310
        %938 = vmatmul.mubr.bf16.gmra.mrb[0].mxu0 %v309
        %v939 = vpop.f32.mrb[0].mxu0
        %v940 = vadd.f32 %v900, %v939
        %v941 = vpop.f32.mrb[0].mxu0
        %v942 = vpop.f32.mrb[0].mxu0
        %v943 = vpop.f32.mrb[0].mxu0
        %944 = vdwg.mxu0
        %945 = vmatprep.subr.bf16.mxu0 0
        %946 = vmatpush1.bf16.msra.mxu0 %v745
        %947 = vmatprep.subr.bf16.mxu0 0
        %948 = vmatpush1.bf16.msra.mxu0 %v746
        %949 = vmatprep.subr.bf16.mxu0 0
        %950 = vmatpush1.bf16.msra.mxu0 %v747
        %951 = vmatprep.subr.bf16.mxu0 0
        %952 = vmatpush1.bf16.msra.mxu0 %v748
        %953 = vmatprep.subr.bf16.mxu0 0
        %954 = vmatpush1.bf16.msra.mxu0 %v749
        %955 = vmatprep.subr.bf16.mxu0 0
        %956 = vmatpush1.bf16.msra.mxu0 %v750
        %957 = vmatprep.subr.bf16.mxu0 0
        %958 = vmatpush1.bf16.msra.mxu0 %v751
        %959 = vmatprep.subr.bf16.mxu0 0
        %960 = vmatpush1.bf16.msra.mxu0 %v752
        %961 = vmatprep.subr.bf16.mxu0 0
        %962 = vmatpush1.bf16.msra.mxu0 %v753
        %963 = vmatprep.subr.bf16.mxu0 0
        %964 = vmatpush1.bf16.msra.mxu0 %v754
        %965 = vmatprep.subr.bf16.mxu0 0
        %966 = vmatpush1.bf16.msra.mxu0 %v755
        %967 = vmatprep.subr.bf16.mxu0 0
        %968 = vmatpush1.bf16.msra.mxu0 %v756
        %969 = vmatprep.subr.bf16.mxu0 0
        %970 = vmatpush1.bf16.msra.mxu0 %v757
        %971 = vmatprep.subr.bf16.mxu0 0
        %972 = vmatpush1.bf16.msra.mxu0 %v758
        %973 = vmatprep.subr.bf16.mxu0 0
        %974 = vmatpush1.bf16.msra.mxu0 %v759
        %975 = vmatprep.subr.bf16.mxu0 0
        %976 = vmatpush1.bf16.msra.mxu0 %v760
        %977 = vmatprep.mubr.bf16.mxu0 %v312
        %978 = vmatmul.mubr.bf16.gmra.mrb[0].mxu0 %v311
        %v979 = vpop.f32.mrb[0].mxu0
        %v980 = vadd.f32 %v940, %v979
        %v981 = vpop.f32.mrb[0].mxu0
        %v982 = vpop.f32.mrb[0].mxu0
        %v983 = vpop.f32.mrb[0].mxu0
        %984 = vdwg.mxu0
        %v985 = vpack.c.bf16 %v980, %v980
        %v986 = vld [vmem:[%s3] sm:$0x1]
        %v988 = vpack.i.b16 %v986, %v986
        %v990 = vlaneseq
        %v991 = vshrl.u32 %v990, 7
        %v992 = vsub.s32 0, %v991
        %v993 = vrot.slane %v988, %v992
        %v994 = vadd.bf16 %v985, %v993
        %v995 = vmax.bf16 %v994, 0
        %v996 = vld [vmem:[#allocation4] sm:$0xf]
        %v997 = vld [vmem:[#allocation4 + $0x4] sm:$0xf]
        %v998 = vld [vmem:[#allocation4 + $0x8] sm:$0xf]
        %v999 = vld [vmem:[#allocation4 + $0xc] sm:$0xf]
        %v1000 = vld [vmem:[#allocation4 + $0x10] sm:$0xf]
        %v1001 = vld [vmem:[#allocation4 + $0x14] sm:$0xf]
        %v1002 = vld [vmem:[#allocation4 + $0x18] sm:$0xf]
        %v1003 = vld [vmem:[#allocation4 + $0x1c] sm:$0xf]
        %v1004 = vld [vmem:[#allocation4 + $0x20] sm:$0xf]
        %v1005 = vld [vmem:[#allocation4 + $0x24] sm:$0xf]
        %v1006 = vld [vmem:[#allocation4 + $0x28] sm:$0xf]
        %v1007 = vld [vmem:[#allocation4 + $0x2c] sm:$0xf]
        %v1008 = vld [vmem:[#allocation4 + $0x30] sm:$0xf]
        %v1009 = vld [vmem:[#allocation4 + $0x34] sm:$0xf]
        %v1010 = vld [vmem:[#allocation4 + $0x38] sm:$0xf]
        %v1011 = vld [vmem:[#allocation4 + $0x3c] sm:$0xf]
        %v1028 = vunpack.c.l.b16 %v996
        %v1029 = vunpack.c.l.b16 %v997
        %v1030 = vunpack.c.l.b16 %v998
        %v1031 = vunpack.c.l.b16 %v999
        %v1032 = vunpack.c.l.b16 %v1000
        %v1033 = vunpack.c.l.b16 %v1001
        %v1034 = vunpack.c.l.b16 %v1002
        %v1035 = vunpack.c.l.b16 %v1003
        %v1036 = vunpack.c.l.b16 %v1004
        %v1037 = vunpack.c.l.b16 %v1005
        %v1038 = vunpack.c.l.b16 %v1006
        %v1039 = vunpack.c.l.b16 %v1007
        %v1040 = vunpack.c.l.b16 %v1008
        %v1041 = vunpack.c.l.b16 %v1009
        %v1042 = vunpack.c.l.b16 %v1010
        %v1043 = vunpack.c.l.b16 %v1011
        %v1044 = vpack.c.b16 %v1029, %v1028
        %v1045 = vpack.c.b16 %v1031, %v1030
        %v1046 = vpack.c.b16 %v1033, %v1032
        %v1047 = vpack.c.b16 %v1035, %v1034
        %v1048 = vpack.c.b16 %v1037, %v1036
        %v1049 = vpack.c.b16 %v1039, %v1038
        %v1050 = vpack.c.b16 %v1041, %v1040
        %v1051 = vpack.c.b16 %v1043, %v1042
        %1060 = vmatprep.subr.bf16.mxu0 0
        %1061 = vmatpush1.bf16.msra.mxu0 %v1044
        %1062 = vmatprep.subr.bf16.mxu0 0
        %1063 = vmatpush1.bf16.msra.mxu0 %v1045
        %1064 = vmatprep.subr.bf16.mxu0 0
        %1065 = vmatpush1.bf16.msra.mxu0 %v1046
        %1066 = vmatprep.subr.bf16.mxu0 0
        %1067 = vmatpush1.bf16.msra.mxu0 %v1047
        %1068 = vmatprep.subr.bf16.mxu0 0
        %1069 = vmatpush1.bf16.msra.mxu0 %v1048
        %1070 = vmatprep.subr.bf16.mxu0 0
        %1071 = vmatpush1.bf16.msra.mxu0 %v1049
        %1072 = vmatprep.subr.bf16.mxu0 0
        %1073 = vmatpush1.bf16.msra.mxu0 %v1050
        %1074 = vmatprep.subr.bf16.mxu0 0
        %1075 = vmatpush1.bf16.msra.mxu0 %v1051
        %1076 = vmatprep.subr.bf16.mxu0 0
        %1077 = vmatpush1.bf16.msra.mxu0 0
        %1078 = vmatprep.subr.bf16.mxu0 0
        %1079 = vmatpush1.bf16.msra.mxu0 0
        %1080 = vmatprep.subr.bf16.mxu0 0
        %1081 = vmatpush1.bf16.msra.mxu0 0
        %1082 = vmatprep.subr.bf16.mxu0 0
        %1083 = vmatpush1.bf16.msra.mxu0 0
        %1084 = vmatprep.subr.bf16.mxu0 0
        %1085 = vmatpush1.bf16.msra.mxu0 0
        %1086 = vmatprep.subr.bf16.mxu0 0
        %1087 = vmatpush1.bf16.msra.mxu0 0
        %1088 = vmatprep.subr.bf16.mxu0 0
        %1089 = vmatpush1.bf16.msra.mxu0 0
        %1090 = vmatprep.subr.bf16.mxu0 0
        %1091 = vmatpush1.bf16.msra.mxu0 0
        %1092 = vmatprep.mubr.bf16.mxu0 0
        %1093 = vmatmul.mubr.bf16.gmra.mrb[0].mxu0 %v995
        %v1094 = vpop.f32.mrb[0].mxu0
        %v1095 = vadd.f32 0.0, %v1094
        %v1096 = vpop.f32.mrb[0].mxu0
        %v1097 = vpop.f32.mrb[0].mxu0
        %v1098 = vpop.f32.mrb[0].mxu0
        %1099 = vdwg.mxu0
        %v1100 = vpack.c.bf16 %v1095, %v1095
        %v1101 = vshrl.u32 %v986, 16
        %v1102 = vpack.i.b16 %v1101, %v1101
        %v1104 = vlaneseq
        %v1105 = vshrl.u32 %v1104, 7
        %v1106 = vsub.s32 0, %v1105
        %v1107 = vrot.slane %v1102, %v1106
        %v1108 = vadd.bf16 %v1100, %v1107
        %v1109 = vmax.bf16 %v1108, 0
        %s1110 = scalar_lea.vmem [#allocation4], 64
        %v1111 = vld [vmem:[%s1110] sm:$0xf]
        %v1112 = vld [vmem:[%s1110 + $0x4] sm:$0xf]
        %v1113 = vld [vmem:[%s1110 + $0x8] sm:$0xf]
        %v1114 = vld [vmem:[%s1110 + $0xc] sm:$0xf]
        %v1115 = vld [vmem:[%s1110 + $0x10] sm:$0xf]
        %v1116 = vld [vmem:[%s1110 + $0x14] sm:$0xf]
        %v1117 = vld [vmem:[%s1110 + $0x18] sm:$0xf]
        %v1118 = vld [vmem:[%s1110 + $0x1c] sm:$0xf]
        %v1119 = vld [vmem:[%s1110 + $0x20] sm:$0xf]
        %v1120 = vld [vmem:[%s1110 + $0x24] sm:$0xf]
        %v1121 = vld [vmem:[%s1110 + $0x28] sm:$0xf]
        %v1122 = vld [vmem:[%s1110 + $0x2c] sm:$0xf]
        %v1123 = vld [vmem:[%s1110 + $0x30] sm:$0xf]
        %v1124 = vld [vmem:[%s1110 + $0x34] sm:$0xf]
        %v1125 = vld [vmem:[%s1110 + $0x38] sm:$0xf]
        %v1126 = vld [vmem:[%s1110 + $0x3c] sm:$0xf]
        %v1143 = vunpack.c.l.b16 %v1111
        %v1144 = vunpack.c.l.b16 %v1112
        %v1145 = vunpack.c.l.b16 %v1113
        %v1146 = vunpack.c.l.b16 %v1114
        %v1147 = vunpack.c.l.b16 %v1115
        %v1148 = vunpack.c.l.b16 %v1116
        %v1149 = vunpack.c.l.b16 %v1117
        %v1150 = vunpack.c.l.b16 %v1118
        %v1151 = vunpack.c.l.b16 %v1119
        %v1152 = vunpack.c.l.b16 %v1120
        %v1153 = vunpack.c.l.b16 %v1121
        %v1154 = vunpack.c.l.b16 %v1122
        %v1155 = vunpack.c.l.b16 %v1123
        %v1156 = vunpack.c.l.b16 %v1124
        %v1157 = vunpack.c.l.b16 %v1125
        %v1158 = vunpack.c.l.b16 %v1126
        %v1159 = vpack.c.b16 %v1144, %v1143
        %v1160 = vpack.c.b16 %v1146, %v1145
        %v1161 = vpack.c.b16 %v1148, %v1147
        %v1162 = vpack.c.b16 %v1150, %v1149
        %v1163 = vpack.c.b16 %v1152, %v1151
        %v1164 = vpack.c.b16 %v1154, %v1153
        %v1165 = vpack.c.b16 %v1156, %v1155
        %v1166 = vpack.c.b16 %v1158, %v1157
        %1175 = vmatprep.subr.bf16.mxu0 0
        %1176 = vmatpush1.bf16.msra.mxu0 %v1159
        %1177 = vmatprep.subr.bf16.mxu0 0
        %1178 = vmatpush1.bf16.msra.mxu0 %v1160
        %1179 = vmatprep.subr.bf16.mxu0 0
        %1180 = vmatpush1.bf16.msra.mxu0 %v1161
        %1181 = vmatprep.subr.bf16.mxu0 0
        %1182 = vmatpush1.bf16.msra.mxu0 %v1162
        %1183 = vmatprep.subr.bf16.mxu0 0
        %1184 = vmatpush1.bf16.msra.mxu0 %v1163
        %1185 = vmatprep.subr.bf16.mxu0 0
        %1186 = vmatpush1.bf16.msra.mxu0 %v1164
        %1187 = vmatprep.subr.bf16.mxu0 0
        %1188 = vmatpush1.bf16.msra.mxu0 %v1165
        %1189 = vmatprep.subr.bf16.mxu0 0
        %1190 = vmatpush1.bf16.msra.mxu0 %v1166
        %1191 = vmatprep.subr.bf16.mxu0 0
        %1192 = vmatpush1.bf16.msra.mxu0 0
        %1193 = vmatprep.subr.bf16.mxu0 0
        %1194 = vmatpush1.bf16.msra.mxu0 0
        %1195 = vmatprep.subr.bf16.mxu0 0
        %1196 = vmatpush1.bf16.msra.mxu0 0
        %1197 = vmatprep.subr.bf16.mxu0 0
        %1198 = vmatpush1.bf16.msra.mxu0 0
        %1199 = vmatprep.subr.bf16.mxu0 0
        %1200 = vmatpush1.bf16.msra.mxu0 0
        %1201 = vmatprep.subr.bf16.mxu0 0
        %1202 = vmatpush1.bf16.msra.mxu0 0
        %1203 = vmatprep.subr.bf16.mxu0 0
        %1204 = vmatpush1.bf16.msra.mxu0 0
        %1205 = vmatprep.subr.bf16.mxu0 0
        %1206 = vmatpush1.bf16.msra.mxu0 0
        %1207 = vmatprep.mubr.bf16.mxu0 0
        %1208 = vmatmul.mubr.bf16.gmra.mrb[0].mxu0 %v1109
        %v1209 = vpop.f32.mrb[0].mxu0
        %v1210 = vadd.f32 0.0, %v1209
        %v1211 = vpop.f32.mrb[0].mxu0
        %v1212 = vpop.f32.mrb[0].mxu0
        %v1213 = vpop.f32.mrb[0].mxu0
        %1214 = vdwg.mxu0
        %v1215 = vpack.c.bf16 %v1210, %v1210
        %v1216 = vld [vmem:[%s3] sm:$0x2]
        %v1218 = vpack.i.b16 %v1216, %v1216
        %v1220 = vlaneseq
        %v1221 = vshrl.u32 %v1220, 7
        %v1222 = vsub.s32 1, %v1221
        %v1223 = vrot.slane %v1218, %v1222
        %v1224 = vadd.bf16 %v1215, %v1223
        %v1225 = vmax.bf16 %v1224, 0
        %s1226 = scalar_lea.vmem [#allocation4], 128
        %v1227 = vld [vmem:[%s1226] sm:$0xf]
        %v1228 = vld [vmem:[%s1226 + $0x4] sm:$0xf]
        %v1229 = vld [vmem:[%s1226 + $0x8] sm:$0xf]
        %v1230 = vld [vmem:[%s1226 + $0xc] sm:$0xf]
        %v1231 = vld [vmem:[%s1226 + $0x10] sm:$0xf]
        %v1232 = vld [vmem:[%s1226 + $0x14] sm:$0xf]
        %v1233 = vld [vmem:[%s1226 + $0x18] sm:$0xf]
        %v1234 = vld [vmem:[%s1226 + $0x1c] sm:$0xf]
        %v1235 = vld [vmem:[%s1226 + $0x20] sm:$0xf]
        %v1236 = vld [vmem:[%s1226 + $0x24] sm:$0xf]
        %v1237 = vld [vmem:[%s1226 + $0x28] sm:$0xf]
        %v1238 = vld [vmem:[%s1226 + $0x2c] sm:$0xf]
        %v1239 = vld [vmem:[%s1226 + $0x30] sm:$0xf]
        %v1240 = vld [vmem:[%s1226 + $0x34] sm:$0xf]
        %v1241 = vld [vmem:[%s1226 + $0x38] sm:$0xf]
        %v1242 = vld [vmem:[%s1226 + $0x3c] sm:$0xf]
        %v1259 = vunpack.c.l.b16 %v1227
        %v1260 = vunpack.c.l.b16 %v1228
        %v1261 = vunpack.c.l.b16 %v1229
        %v1262 = vunpack.c.l.b16 %v1230
        %v1263 = vunpack.c.l.b16 %v1231
        %v1264 = vunpack.c.l.b16 %v1232
        %v1265 = vunpack.c.l.b16 %v1233
        %v1266 = vunpack.c.l.b16 %v1234
        %v1267 = vunpack.c.l.b16 %v1235
        %v1268 = vunpack.c.l.b16 %v1236
        %v1269 = vunpack.c.l.b16 %v1237
        %v1270 = vunpack.c.l.b16 %v1238
        %v1271 = vunpack.c.l.b16 %v1239
        %v1272 = vunpack.c.l.b16 %v1240
        %v1273 = vunpack.c.l.b16 %v1241
        %v1274 = vunpack.c.l.b16 %v1242
        %v1275 = vpack.c.b16 %v1260, %v1259
        %v1276 = vpack.c.b16 %v1262, %v1261
        %v1277 = vpack.c.b16 %v1264, %v1263
        %v1278 = vpack.c.b16 %v1266, %v1265
        %v1279 = vpack.c.b16 %v1268, %v1267
        %v1280 = vpack.c.b16 %v1270, %v1269
        %v1281 = vpack.c.b16 %v1272, %v1271
        %v1282 = vpack.c.b16 %v1274, %v1273
        %1291 = vmatprep.subr.bf16.mxu0 0
        %1292 = vmatpush1.bf16.msra.mxu0 %v1275
        %1293 = vmatprep.subr.bf16.mxu0 0
        %1294 = vmatpush1.bf16.msra.mxu0 %v1276
        %1295 = vmatprep.subr.bf16.mxu0 0
        %1296 = vmatpush1.bf16.msra.mxu0 %v1277
        %1297 = vmatprep.subr.bf16.mxu0 0
        %1298 = vmatpush1.bf16.msra.mxu0 %v1278
        %1299 = vmatprep.subr.bf16.mxu0 0
        %1300 = vmatpush1.bf16.msra.mxu0 %v1279
        %1301 = vmatprep.subr.bf16.mxu0 0
        %1302 = vmatpush1.bf16.msra.mxu0 %v1280
        %1303 = vmatprep.subr.bf16.mxu0 0
        %1304 = vmatpush1.bf16.msra.mxu0 %v1281
        %1305 = vmatprep.subr.bf16.mxu0 0
        %1306 = vmatpush1.bf16.msra.mxu0 %v1282
        %1307 = vmatprep.subr.bf16.mxu0 0
        %1308 = vmatpush1.bf16.msra.mxu0 0
        %1309 = vmatprep.subr.bf16.mxu0 0
        %1310 = vmatpush1.bf16.msra.mxu0 0
        %1311 = vmatprep.subr.bf16.mxu0 0
        %1312 = vmatpush1.bf16.msra.mxu0 0
        %1313 = vmatprep.subr.bf16.mxu0 0
        %1314 = vmatpush1.bf16.msra.mxu0 0
        %1315 = vmatprep.subr.bf16.mxu0 0
        %1316 = vmatpush1.bf16.msra.mxu0 0
        %1317 = vmatprep.subr.bf16.mxu0 0
        %1318 = vmatpush1.bf16.msra.mxu0 0
        %1319 = vmatprep.subr.bf16.mxu0 0
        %1320 = vmatpush1.bf16.msra.mxu0 0
        %1321 = vmatprep.subr.bf16.mxu0 0
        %1322 = vmatpush1.bf16.msra.mxu0 0
        %1323 = vmatprep.mubr.bf16.mxu0 0
        %1324 = vmatmul.mubr.bf16.gmra.mrb[0].mxu0 %v1225
        %v1325 = vpop.f32.mrb[0].mxu0
        %v1326 = vadd.f32 0.0, %v1325
        %v1327 = vpop.f32.mrb[0].mxu0
        %v1328 = vpop.f32.mrb[0].mxu0
        %v1329 = vpop.f32.mrb[0].mxu0
        %1330 = vdwg.mxu0
        %v1331 = vpack.c.bf16 %v1326, %v1326
        %v1332 = vshrl.u32 %v1216, 16
        %v1333 = vpack.i.b16 %v1332, %v1332
        %v1335 = vlaneseq
        %v1336 = vshrl.u32 %v1335, 7
        %v1337 = vsub.s32 1, %v1336
        %v1338 = vrot.slane %v1333, %v1337
        %v1339 = vadd.bf16 %v1331, %v1338
        %v1340 = vmax.bf16 %v1339, 0
        %s1341 = scalar_lea.vmem [#allocation4], 192
        %v1342 = vld [vmem:[%s1341] sm:$0xf]
        %v1343 = vld [vmem:[%s1341 + $0x4] sm:$0xf]
        %v1344 = vld [vmem:[%s1341 + $0x8] sm:$0xf]
        %v1345 = vld [vmem:[%s1341 + $0xc] sm:$0xf]
        %v1346 = vld [vmem:[%s1341 + $0x10] sm:$0xf]
        %v1347 = vld [vmem:[%s1341 + $0x14] sm:$0xf]
        %v1348 = vld [vmem:[%s1341 + $0x18] sm:$0xf]
        %v1349 = vld [vmem:[%s1341 + $0x1c] sm:$0xf]
        %v1350 = vld [vmem:[%s1341 + $0x20] sm:$0xf]
        %v1351 = vld [vmem:[%s1341 + $0x24] sm:$0xf]
        %v1352 = vld [vmem:[%s1341 + $0x28] sm:$0xf]
        %v1353 = vld [vmem:[%s1341 + $0x2c] sm:$0xf]
        %v1354 = vld [vmem:[%s1341 + $0x30] sm:$0xf]
        %v1355 = vld [vmem:[%s1341 + $0x34] sm:$0xf]
        %v1356 = vld [vmem:[%s1341 + $0x38] sm:$0xf]
        %v1357 = vld [vmem:[%s1341 + $0x3c] sm:$0xf]
        %v1374 = vunpack.c.l.b16 %v1342
        %v1375 = vunpack.c.l.b16 %v1343
        %v1376 = vunpack.c.l.b16 %v1344
        %v1377 = vunpack.c.l.b16 %v1345
        %v1378 = vunpack.c.l.b16 %v1346
        %v1379 = vunpack.c.l.b16 %v1347
        %v1380 = vunpack.c.l.b16 %v1348
        %v1381 = vunpack.c.l.b16 %v1349
        %v1382 = vunpack.c.l.b16 %v1350
        %v1383 = vunpack.c.l.b16 %v1351
        %v1384 = vunpack.c.l.b16 %v1352
        %v1385 = vunpack.c.l.b16 %v1353
        %v1386 = vunpack.c.l.b16 %v1354
        %v1387 = vunpack.c.l.b16 %v1355
        %v1388 = vunpack.c.l.b16 %v1356
        %v1389 = vunpack.c.l.b16 %v1357
        %v1390 = vpack.c.b16 %v1375, %v1374
        %v1391 = vpack.c.b16 %v1377, %v1376
        %v1392 = vpack.c.b16 %v1379, %v1378
        %v1393 = vpack.c.b16 %v1381, %v1380
        %v1394 = vpack.c.b16 %v1383, %v1382
        %v1395 = vpack.c.b16 %v1385, %v1384
        %v1396 = vpack.c.b16 %v1387, %v1386
        %v1397 = vpack.c.b16 %v1389, %v1388
        %1406 = vmatprep.subr.bf16.mxu0 0
        %1407 = vmatpush1.bf16.msra.mxu0 %v1390
        %1408 = vmatprep.subr.bf16.mxu0 0
        %1409 = vmatpush1.bf16.msra.mxu0 %v1391
        %1410 = vmatprep.subr.bf16.mxu0 0
        %1411 = vmatpush1.bf16.msra.mxu0 %v1392
        %1412 = vmatprep.subr.bf16.mxu0 0
        %1413 = vmatpush1.bf16.msra.mxu0 %v1393
        %1414 = vmatprep.subr.bf16.mxu0 0
        %1415 = vmatpush1.bf16.msra.mxu0 %v1394
        %1416 = vmatprep.subr.bf16.mxu0 0
        %1417 = vmatpush1.bf16.msra.mxu0 %v1395
        %1418 = vmatprep.subr.bf16.mxu0 0
        %1419 = vmatpush1.bf16.msra.mxu0 %v1396
        %1420 = vmatprep.subr.bf16.mxu0 0
        %1421 = vmatpush1.bf16.msra.mxu0 %v1397
        %1422 = vmatprep.subr.bf16.mxu0 0
        %1423 = vmatpush1.bf16.msra.mxu0 0
        %1424 = vmatprep.subr.bf16.mxu0 0
        %1425 = vmatpush1.bf16.msra.mxu0 0
        %1426 = vmatprep.subr.bf16.mxu0 0
        %1427 = vmatpush1.bf16.msra.mxu0 0
        %1428 = vmatprep.subr.bf16.mxu0 0
        %1429 = vmatpush1.bf16.msra.mxu0 0
        %1430 = vmatprep.subr.bf16.mxu0 0
        %1431 = vmatpush1.bf16.msra.mxu0 0
        %1432 = vmatprep.subr.bf16.mxu0 0
        %1433 = vmatpush1.bf16.msra.mxu0 0
        %1434 = vmatprep.subr.bf16.mxu0 0
        %1435 = vmatpush1.bf16.msra.mxu0 0
        %1436 = vmatprep.subr.bf16.mxu0 0
        %1437 = vmatpush1.bf16.msra.mxu0 0
        %1438 = vmatprep.mubr.bf16.mxu0 0
        %1439 = vmatmul.mubr.bf16.gmra.mrb[0].mxu0 %v1340
        %v1440 = vpop.f32.mrb[0].mxu0
        %v1441 = vadd.f32 0.0, %v1440
        %v1442 = vpop.f32.mrb[0].mxu0
        %v1443 = vpop.f32.mrb[0].mxu0
        %v1444 = vpop.f32.mrb[0].mxu0
        %1445 = vdwg.mxu0
        %v1446 = vpack.c.bf16 %v1441, %v1441
        %v1447 = vld [vmem:[%s3] sm:$0x4]
        %v1449 = vpack.i.b16 %v1447, %v1447
        %v1451 = vlaneseq
        %v1452 = vshrl.u32 %v1451, 7
        %v1453 = vsub.s32 2, %v1452
        %v1454 = vrot.slane %v1449, %v1453
        %v1455 = vadd.bf16 %v1446, %v1454
        %s1456 = scalar_lea.vmem [#allocation4], 256
        %v1457 = vld [vmem:[%s1456] sm:$0xf]
        %v1458 = vld [vmem:[%s1456 + $0x4] sm:$0xf]
        %v1459 = vld [vmem:[%s1456 + $0x8] sm:$0xf]
        %v1460 = vld [vmem:[%s1456 + $0xc] sm:$0xf]
        %v1461 = vld [vmem:[%s1456 + $0x10] sm:$0xf]
        %v1462 = vld [vmem:[%s1456 + $0x14] sm:$0xf]
        %v1463 = vld [vmem:[%s1456 + $0x18] sm:$0xf]
        %v1464 = vld [vmem:[%s1456 + $0x1c] sm:$0xf]
        %v1465 = vld [vmem:[%s1456 + $0x20] sm:$0xf]
        %v1466 = vld [vmem:[%s1456 + $0x24] sm:$0xf]
        %v1467 = vld [vmem:[%s1456 + $0x28] sm:$0xf]
        %v1468 = vld [vmem:[%s1456 + $0x2c] sm:$0xf]
        %v1469 = vld [vmem:[%s1456 + $0x30] sm:$0xf]
        %v1470 = vld [vmem:[%s1456 + $0x34] sm:$0xf]
        %v1471 = vld [vmem:[%s1456 + $0x38] sm:$0xf]
        %v1472 = vld [vmem:[%s1456 + $0x3c] sm:$0xf]
        %v1489 = vunpack.c.l.b16 %v1457
        %v1490 = vunpack.c.l.b16 %v1458
        %v1491 = vunpack.c.l.b16 %v1459
        %v1492 = vunpack.c.l.b16 %v1460
        %v1493 = vunpack.c.l.b16 %v1461
        %v1494 = vunpack.c.l.b16 %v1462
        %v1495 = vunpack.c.l.b16 %v1463
        %v1496 = vunpack.c.l.b16 %v1464
        %v1497 = vunpack.c.l.b16 %v1465
        %v1498 = vunpack.c.l.b16 %v1466
        %v1499 = vunpack.c.l.b16 %v1467
        %v1500 = vunpack.c.l.b16 %v1468
        %v1501 = vunpack.c.l.b16 %v1469
        %v1502 = vunpack.c.l.b16 %v1470
        %v1503 = vunpack.c.l.b16 %v1471
        %v1504 = vunpack.c.l.b16 %v1472
        %v1505 = vpack.c.b16 %v1490, %v1489
        %v1506 = vpack.c.b16 %v1492, %v1491
        %v1507 = vpack.c.b16 %v1494, %v1493
        %v1508 = vpack.c.b16 %v1496, %v1495
        %v1509 = vpack.c.b16 %v1498, %v1497
        %v1510 = vpack.c.b16 %v1500, %v1499
        %v1511 = vpack.c.b16 %v1502, %v1501
        %v1512 = vpack.c.b16 %v1504, %v1503
        %1521 = vmatprep.subr.bf16.mxu0 0
        %1522 = vmatpush1.bf16.msra.mxu0 %v1505
        %1523 = vmatprep.subr.bf16.mxu0 0
        %1524 = vmatpush1.bf16.msra.mxu0 %v1506
        %1525 = vmatprep.subr.bf16.mxu0 0
        %1526 = vmatpush1.bf16.msra.mxu0 %v1507
        %1527 = vmatprep.subr.bf16.mxu0 0
        %1528 = vmatpush1.bf16.msra.mxu0 %v1508
        %1529 = vmatprep.subr.bf16.mxu0 0
        %1530 = vmatpush1.bf16.msra.mxu0 %v1509
        %1531 = vmatprep.subr.bf16.mxu0 0
        %1532 = vmatpush1.bf16.msra.mxu0 %v1510
        %1533 = vmatprep.subr.bf16.mxu0 0
        %1534 = vmatpush1.bf16.msra.mxu0 %v1511
        %1535 = vmatprep.subr.bf16.mxu0 0
        %1536 = vmatpush1.bf16.msra.mxu0 %v1512
        %1537 = vmatprep.subr.bf16.mxu0 0
        %1538 = vmatpush1.bf16.msra.mxu0 0
        %1539 = vmatprep.subr.bf16.mxu0 0
        %1540 = vmatpush1.bf16.msra.mxu0 0
        %1541 = vmatprep.subr.bf16.mxu0 0
        %1542 = vmatpush1.bf16.msra.mxu0 0
        %1543 = vmatprep.subr.bf16.mxu0 0
        %1544 = vmatpush1.bf16.msra.mxu0 0
        %1545 = vmatprep.subr.bf16.mxu0 0
        %1546 = vmatpush1.bf16.msra.mxu0 0
        %1547 = vmatprep.subr.bf16.mxu0 0
        %1548 = vmatpush1.bf16.msra.mxu0 0
        %1549 = vmatprep.subr.bf16.mxu0 0
        %1550 = vmatpush1.bf16.msra.mxu0 0
        %1551 = vmatprep.subr.bf16.mxu0 0
        %1552 = vmatpush1.bf16.msra.mxu0 0
        %1553 = vmatprep.mubr.bf16.mxu0 0
        %1554 = vmatmul.mubr.bf16.gmra.mrb[0].mxu0 %v1455
        %v1555 = vpop.f32.mrb[0].mxu0
        %v1556 = vadd.f32 0.0, %v1555
        %v1557 = vpop.f32.mrb[0].mxu0
        %v1558 = vpop.f32.mrb[0].mxu0
        %v1559 = vpop.f32.mrb[0].mxu0
        %1560 = vdwg.mxu0
        %v1561 = vpack.c.bf16 %v1556, %v1556
        %v1562 = vshrl.u32 %v1447, 16
        %v1563 = vpack.i.b16 %v1562, %v1562
        %v1565 = vlaneseq
        %v1566 = vshrl.u32 %v1565, 7
        %v1567 = vsub.s32 2, %v1566
        %v1568 = vrot.slane %v1563, %v1567
        %v1569 = vadd.bf16 %v1561, %v1568
        %v1570 = vmax.bf16 %v1569, 0
        %s1571 = scalar_lea.vmem [#allocation4], 320
        %v1572 = vld [vmem:[%s1571] sm:$0xf]
        %v1573 = vld [vmem:[%s1571 + $0x4] sm:$0xf]
        %v1574 = vld [vmem:[%s1571 + $0x8] sm:$0xf]
        %v1575 = vld [vmem:[%s1571 + $0xc] sm:$0xf]
        %v1576 = vld [vmem:[%s1571 + $0x10] sm:$0xf]
        %v1577 = vld [vmem:[%s1571 + $0x14] sm:$0xf]
        %v1578 = vld [vmem:[%s1571 + $0x18] sm:$0xf]
        %v1579 = vld [vmem:[%s1571 + $0x1c] sm:$0xf]
        %v1580 = vld [vmem:[%s1571 + $0x20] sm:$0xf]
        %v1581 = vld [vmem:[%s1571 + $0x24] sm:$0xf]
        %v1582 = vld [vmem:[%s1571 + $0x28] sm:$0xf]
        %v1583 = vld [vmem:[%s1571 + $0x2c] sm:$0xf]
        %v1584 = vld [vmem:[%s1571 + $0x30] sm:$0xf]
        %v1585 = vld [vmem:[%s1571 + $0x34] sm:$0xf]
        %v1586 = vld [vmem:[%s1571 + $0x38] sm:$0xf]
        %v1587 = vld [vmem:[%s1571 + $0x3c] sm:$0xf]
        %v1604 = vunpack.c.l.b16 %v1572
        %v1605 = vunpack.c.l.b16 %v1573
        %v1606 = vunpack.c.l.b16 %v1574
        %v1607 = vunpack.c.l.b16 %v1575
        %v1608 = vunpack.c.l.b16 %v1576
        %v1609 = vunpack.c.l.b16 %v1577
        %v1610 = vunpack.c.l.b16 %v1578
        %v1611 = vunpack.c.l.b16 %v1579
        %v1612 = vunpack.c.l.b16 %v1580
        %v1613 = vunpack.c.l.b16 %v1581
        %v1614 = vunpack.c.l.b16 %v1582
        %v1615 = vunpack.c.l.b16 %v1583
        %v1616 = vunpack.c.l.b16 %v1584
        %v1617 = vunpack.c.l.b16 %v1585
        %v1618 = vunpack.c.l.b16 %v1586
        %v1619 = vunpack.c.l.b16 %v1587
        %v1620 = vpack.c.b16 %v1605, %v1604
        %v1621 = vpack.c.b16 %v1607, %v1606
        %v1622 = vpack.c.b16 %v1609, %v1608
        %v1623 = vpack.c.b16 %v1611, %v1610
        %v1624 = vpack.c.b16 %v1613, %v1612
        %v1625 = vpack.c.b16 %v1615, %v1614
        %v1626 = vpack.c.b16 %v1617, %v1616
        %v1627 = vpack.c.b16 %v1619, %v1618
        %1636 = vmatprep.subr.bf16.mxu0 0
        %1637 = vmatpush1.bf16.msra.mxu0 %v1620
        %1638 = vmatprep.subr.bf16.mxu0 0
        %1639 = vmatpush1.bf16.msra.mxu0 %v1621
        %1640 = vmatprep.subr.bf16.mxu0 0
        %1641 = vmatpush1.bf16.msra.mxu0 %v1622
        %1642 = vmatprep.subr.bf16.mxu0 0
        %1643 = vmatpush1.bf16.msra.mxu0 %v1623
        %1644 = vmatprep.subr.bf16.mxu0 0
        %1645 = vmatpush1.bf16.msra.mxu0 %v1624
        %1646 = vmatprep.subr.bf16.mxu0 0
        %1647 = vmatpush1.bf16.msra.mxu0 %v1625
        %1648 = vmatprep.subr.bf16.mxu0 0
        %1649 = vmatpush1.bf16.msra.mxu0 %v1626
        %1650 = vmatprep.subr.bf16.mxu0 0
        %1651 = vmatpush1.bf16.msra.mxu0 %v1627
        %1652 = vmatprep.subr.bf16.mxu0 0
        %1653 = vmatpush1.bf16.msra.mxu0 0
        %1654 = vmatprep.subr.bf16.mxu0 0
        %1655 = vmatpush1.bf16.msra.mxu0 0
        %1656 = vmatprep.subr.bf16.mxu0 0
        %1657 = vmatpush1.bf16.msra.mxu0 0
        %1658 = vmatprep.subr.bf16.mxu0 0
        %1659 = vmatpush1.bf16.msra.mxu0 0
        %1660 = vmatprep.subr.bf16.mxu0 0
        %1661 = vmatpush1.bf16.msra.mxu0 0
        %1662 = vmatprep.subr.bf16.mxu0 0
        %1663 = vmatpush1.bf16.msra.mxu0 0
        %1664 = vmatprep.subr.bf16.mxu0 0
        %1665 = vmatpush1.bf16.msra.mxu0 0
        %1666 = vmatprep.subr.bf16.mxu0 0
        %1667 = vmatpush1.bf16.msra.mxu0 0
        %1668 = vmatprep.mubr.bf16.mxu0 0
        %1669 = vmatmul.mubr.bf16.gmra.mrb[0].mxu0 %v1570
        %v1670 = vpop.f32.mrb[0].mxu0
        %v1671 = vadd.f32 0.0, %v1670
        %v1672 = vpop.f32.mrb[0].mxu0
        %v1673 = vpop.f32.mrb[0].mxu0
        %v1674 = vpop.f32.mrb[0].mxu0
        %1675 = vdwg.mxu0
        %v1676 = vpack.c.bf16 %v1671, %v1671
        %v1677 = vld [vmem:[%s3] sm:$0x8]
        %v1679 = vpack.i.b16 %v1677, %v1677
        %v1681 = vlaneseq
        %v1682 = vshrl.u32 %v1681, 7
        %v1683 = vsub.s32 3, %v1682
        %v1684 = vrot.slane %v1679, %v1683
        %v1685 = vadd.bf16 %v1676, %v1684
        %v1686 = vmax.bf16 %v1685, 0
        %s1687 = scalar_lea.vmem [#allocation4], 384
        %v1688 = vld [vmem:[%s1687] sm:$0xf]
        %v1689 = vld [vmem:[%s1687 + $0x4] sm:$0xf]
        %v1690 = vld [vmem:[%s1687 + $0x8] sm:$0xf]
        %v1691 = vld [vmem:[%s1687 + $0xc] sm:$0xf]
        %v1692 = vld [vmem:[%s1687 + $0x10] sm:$0xf]
        %v1693 = vld [vmem:[%s1687 + $0x14] sm:$0xf]
        %v1694 = vld [vmem:[%s1687 + $0x18] sm:$0xf]
        %v1695 = vld [vmem:[%s1687 + $0x1c] sm:$0xf]
        %v1696 = vld [vmem:[%s1687 + $0x20] sm:$0xf]
        %v1697 = vld [vmem:[%s1687 + $0x24] sm:$0xf]
        %v1698 = vld [vmem:[%s1687 + $0x28] sm:$0xf]
        %v1699 = vld [vmem:[%s1687 + $0x2c] sm:$0xf]
        %v1700 = vld [vmem:[%s1687 + $0x30] sm:$0xf]
        %v1701 = vld [vmem:[%s1687 + $0x34] sm:$0xf]
        %v1702 = vld [vmem:[%s1687 + $0x38] sm:$0xf]
        %v1703 = vld [vmem:[%s1687 + $0x3c] sm:$0xf]
        %v1720 = vunpack.c.l.b16 %v1688
        %v1721 = vunpack.c.l.b16 %v1689
        %v1722 = vunpack.c.l.b16 %v1690
        %v1723 = vunpack.c.l.b16 %v1691
        %v1724 = vunpack.c.l.b16 %v1692
        %v1725 = vunpack.c.l.b16 %v1693
        %v1726 = vunpack.c.l.b16 %v1694
        %v1727 = vunpack.c.l.b16 %v1695
        %v1728 = vunpack.c.l.b16 %v1696
        %v1729 = vunpack.c.l.b16 %v1697
        %v1730 = vunpack.c.l.b16 %v1698
        %v1731 = vunpack.c.l.b16 %v1699
        %v1732 = vunpack.c.l.b16 %v1700
        %v1733 = vunpack.c.l.b16 %v1701
        %v1734 = vunpack.c.l.b16 %v1702
        %v1735 = vunpack.c.l.b16 %v1703
        %v1736 = vpack.c.b16 %v1721, %v1720
        %v1737 = vpack.c.b16 %v1723, %v1722
        %v1738 = vpack.c.b16 %v1725, %v1724
        %v1739 = vpack.c.b16 %v1727, %v1726
        %v1740 = vpack.c.b16 %v1729, %v1728
        %v1741 = vpack.c.b16 %v1731, %v1730
        %v1742 = vpack.c.b16 %v1733, %v1732
        %v1743 = vpack.c.b16 %v1735, %v1734
        %1752 = vmatprep.subr.bf16.mxu0 0
        %1753 = vmatpush1.bf16.msra.mxu0 %v1736
        %1754 = vmatprep.subr.bf16.mxu0 0
        %1755 = vmatpush1.bf16.msra.mxu0 %v1737
        %1756 = vmatprep.subr.bf16.mxu0 0
        %1757 = vmatpush1.bf16.msra.mxu0 %v1738
        %1758 = vmatprep.subr.bf16.mxu0 0
        %1759 = vmatpush1.bf16.msra.mxu0 %v1739
        %1760 = vmatprep.subr.bf16.mxu0 0
        %1761 = vmatpush1.bf16.msra.mxu0 %v1740
        %1762 = vmatprep.subr.bf16.mxu0 0
        %1763 = vmatpush1.bf16.msra.mxu0 %v1741
        %1764 = vmatprep.subr.bf16.mxu0 0
        %1765 = vmatpush1.bf16.msra.mxu0 %v1742
        %1766 = vmatprep.subr.bf16.mxu0 0
        %1767 = vmatpush1.bf16.msra.mxu0 %v1743
        %1768 = vmatprep.subr.bf16.mxu0 0
        %1769 = vmatpush1.bf16.msra.mxu0 0
        %1770 = vmatprep.subr.bf16.mxu0 0
        %1771 = vmatpush1.bf16.msra.mxu0 0
        %1772 = vmatprep.subr.bf16.mxu0 0
        %1773 = vmatpush1.bf16.msra.mxu0 0
        %1774 = vmatprep.subr.bf16.mxu0 0
        %1775 = vmatpush1.bf16.msra.mxu0 0
        %1776 = vmatprep.subr.bf16.mxu0 0
        %1777 = vmatpush1.bf16.msra.mxu0 0
        %1778 = vmatprep.subr.bf16.mxu0 0
        %1779 = vmatpush1.bf16.msra.mxu0 0
        %1780 = vmatprep.subr.bf16.mxu0 0
        %1781 = vmatpush1.bf16.msra.mxu0 0
        %1782 = vmatprep.subr.bf16.mxu0 0
        %1783 = vmatpush1.bf16.msra.mxu0 0
        %1784 = vmatprep.mubr.bf16.mxu0 0
        %1785 = vmatmul.mubr.bf16.gmra.mrb[0].mxu0 %v1686
        %v1786 = vpop.f32.mrb[0].mxu0
        %v1787 = vadd.f32 0.0, %v1786
        %v1788 = vpop.f32.mrb[0].mxu0
        %v1789 = vpop.f32.mrb[0].mxu0
        %v1790 = vpop.f32.mrb[0].mxu0
        %1791 = vdwg.mxu0
        %v1792 = vpack.c.bf16 %v1787, %v1787
        %v1793 = vshrl.u32 %v1677, 16
        %v1794 = vpack.i.b16 %v1793, %v1793
        %v1796 = vlaneseq
        %v1797 = vshrl.u32 %v1796, 7
        %v1798 = vsub.s32 3, %v1797
        %v1799 = vrot.slane %v1794, %v1798
        %v1800 = vadd.bf16 %v1792, %v1799
        %v1801 = vmax.bf16 %v1800, 0
        %s1802 = scalar_lea.vmem [#allocation4], 448
        %v1803 = vld [vmem:[%s1802] sm:$0xf]
        %v1804 = vld [vmem:[%s1802 + $0x4] sm:$0xf]
        %v1805 = vld [vmem:[%s1802 + $0x8] sm:$0xf]
        %v1806 = vld [vmem:[%s1802 + $0xc] sm:$0xf]
        %v1807 = vld [vmem:[%s1802 + $0x10] sm:$0xf]
        %v1808 = vld [vmem:[%s1802 + $0x14] sm:$0xf]
        %v1809 = vld [vmem:[%s1802 + $0x18] sm:$0xf]
        %v1810 = vld [vmem:[%s1802 + $0x1c] sm:$0xf]
        %v1811 = vld [vmem:[%s1802 + $0x20] sm:$0xf]
        %v1812 = vld [vmem:[%s1802 + $0x24] sm:$0xf]
        %v1813 = vld [vmem:[%s1802 + $0x28] sm:$0xf]
        %v1814 = vld [vmem:[%s1802 + $0x2c] sm:$0xf]
        %v1815 = vld [vmem:[%s1802 + $0x30] sm:$0xf]
        %v1816 = vld [vmem:[%s1802 + $0x34] sm:$0xf]
        %v1817 = vld [vmem:[%s1802 + $0x38] sm:$0xf]
        %v1818 = vld [vmem:[%s1802 + $0x3c] sm:$0xf]
        %v1835 = vunpack.c.l.b16 %v1803
        %v1836 = vunpack.c.l.b16 %v1804
        %v1837 = vunpack.c.l.b16 %v1805
        %v1838 = vunpack.c.l.b16 %v1806
        %v1839 = vunpack.c.l.b16 %v1807
        %v1840 = vunpack.c.l.b16 %v1808
        %v1841 = vunpack.c.l.b16 %v1809
        %v1842 = vunpack.c.l.b16 %v1810
        %v1843 = vunpack.c.l.b16 %v1811
        %v1844 = vunpack.c.l.b16 %v1812
        %v1845 = vunpack.c.l.b16 %v1813
        %v1846 = vunpack.c.l.b16 %v1814
        %v1847 = vunpack.c.l.b16 %v1815
        %v1848 = vunpack.c.l.b16 %v1816
        %v1849 = vunpack.c.l.b16 %v1817
        %v1850 = vunpack.c.l.b16 %v1818
        %v1851 = vpack.c.b16 %v1836, %v1835
        %v1852 = vpack.c.b16 %v1838, %v1837
        %v1853 = vpack.c.b16 %v1840, %v1839
        %v1854 = vpack.c.b16 %v1842, %v1841
        %v1855 = vpack.c.b16 %v1844, %v1843
        %v1856 = vpack.c.b16 %v1846, %v1845
        %v1857 = vpack.c.b16 %v1848, %v1847
        %v1858 = vpack.c.b16 %v1850, %v1849
        %1867 = vmatprep.subr.bf16.mxu0 0
        %1868 = vmatpush1.bf16.msra.mxu0 %v1851
        %1869 = vmatprep.subr.bf16.mxu0 0
        %1870 = vmatpush1.bf16.msra.mxu0 %v1852
        %1871 = vmatprep.subr.bf16.mxu0 0
        %1872 = vmatpush1.bf16.msra.mxu0 %v1853
        %1873 = vmatprep.subr.bf16.mxu0 0
        %1874 = vmatpush1.bf16.msra.mxu0 %v1854
        %1875 = vmatprep.subr.bf16.mxu0 0
        %1876 = vmatpush1.bf16.msra.mxu0 %v1855
        %1877 = vmatprep.subr.bf16.mxu0 0
        %1878 = vmatpush1.bf16.msra.mxu0 %v1856
        %1879 = vmatprep.subr.bf16.mxu0 0
        %1880 = vmatpush1.bf16.msra.mxu0 %v1857
        %1881 = vmatprep.subr.bf16.mxu0 0
        %1882 = vmatpush1.bf16.msra.mxu0 %v1858
        %1883 = vmatprep.subr.bf16.mxu0 0
        %1884 = vmatpush1.bf16.msra.mxu0 0
        %1885 = vmatprep.subr.bf16.mxu0 0
        %1886 = vmatpush1.bf16.msra.mxu0 0
        %1887 = vmatprep.subr.bf16.mxu0 0
        %1888 = vmatpush1.bf16.msra.mxu0 0
        %1889 = vmatprep.subr.bf16.mxu0 0
        %1890 = vmatpush1.bf16.msra.mxu0 0
        %1891 = vmatprep.subr.bf16.mxu0 0
        %1892 = vmatpush1.bf16.msra.mxu0 0
        %1893 = vmatprep.subr.bf16.mxu0 0
        %1894 = vmatpush1.bf16.msra.mxu0 0
        %1895 = vmatprep.subr.bf16.mxu0 0
        %1896 = vmatpush1.bf16.msra.mxu0 0
        %1897 = vmatprep.subr.bf16.mxu0 0
        %1898 = vmatpush1.bf16.msra.mxu0 0
        %1899 = vmatprep.mubr.bf16.mxu0 0
        %1900 = vmatmul.mubr.bf16.gmra.mrb[0].mxu0 %v1801
        %v1901 = vpop.f32.mrb[0].mxu0
        %v1902 = vadd.f32 0.0, %v1901
        %v1903 = vpop.f32.mrb[0].mxu0
        %v1904 = vpop.f32.mrb[0].mxu0
        %v1905 = vpop.f32.mrb[0].mxu0
        %1906 = vdwg.mxu0
        %v1907 = vpack.c.bf16 %v1902, %v1902
        %v1908 = vld [vmem:[%s3 + $0x4] sm:$0x1]
        %v1910 = vpack.i.b16 %v1908, %v1908
        %v1912 = vlaneseq
        %v1913 = vshrl.u32 %v1912, 7
        %v1914 = vsub.s32 0, %v1913
        %v1915 = vrot.slane %v1910, %v1914
        %v1916 = vadd.bf16 %v1907, %v1915
        %v1917 = vmax.bf16 %v1916, 0
        %v1918 = vld [vmem:[#allocation6] sm:$0xff]
        %v1919 = vld [vmem:[#allocation6 + $0x8] sm:$0xff]
        %v1920 = vld [vmem:[#allocation6 + $0x10] sm:$0xff]
        %v1921 = vld [vmem:[#allocation6 + $0x18] sm:$0xff]
        %v1922 = vld [vmem:[#allocation6 + $0x20] sm:$0xff]
        %v1923 = vld [vmem:[#allocation6 + $0x28] sm:$0xff]
        %v1924 = vld [vmem:[#allocation6 + $0x30] sm:$0xff]
        %v1925 = vld [vmem:[#allocation6 + $0x38] sm:$0xff]
        %v1926 = vld [vmem:[#allocation6 + $0x40] sm:$0xff]
        %v1927 = vld [vmem:[#allocation6 + $0x48] sm:$0xff]
        %v1928 = vld [vmem:[#allocation6 + $0x50] sm:$0xff]
        %v1929 = vld [vmem:[#allocation6 + $0x58] sm:$0xff]
        %v1930 = vld [vmem:[#allocation6 + $0x60] sm:$0xff]
        %v1931 = vld [vmem:[#allocation6 + $0x68] sm:$0xff]
        %v1932 = vld [vmem:[#allocation6 + $0x70] sm:$0xff]
        %v1933 = vld [vmem:[#allocation6 + $0x78] sm:$0xff]
        %v1934 = vld [vmem:[#allocation6 + $0x80] sm:$0xff]
        %v1935 = vld [vmem:[#allocation6 + $0x88] sm:$0xff]
        %v1936 = vld [vmem:[#allocation6 + $0x90] sm:$0xff]
        %v1937 = vld [vmem:[#allocation6 + $0x98] sm:$0xff]
        %v1938 = vld [vmem:[#allocation6 + $0xa0] sm:$0xff]
        %v1939 = vld [vmem:[#allocation6 + $0xa8] sm:$0xff]
        %v1940 = vld [vmem:[#allocation6 + $0xb0] sm:$0xff]
        %v1941 = vld [vmem:[#allocation6 + $0xb8] sm:$0xff]
        %v1942 = vld [vmem:[#allocation6 + $0xc0] sm:$0xff]
        %v1943 = vld [vmem:[#allocation6 + $0xc8] sm:$0xff]
        %v1944 = vld [vmem:[#allocation6 + $0xd0] sm:$0xff]
        %v1945 = vld [vmem:[#allocation6 + $0xd8] sm:$0xff]
        %v1946 = vld [vmem:[#allocation6 + $0xe0] sm:$0xff]
        %v1947 = vld [vmem:[#allocation6 + $0xe8] sm:$0xff]
        %v1948 = vld [vmem:[#allocation6 + $0xf0] sm:$0xff]
        %v1949 = vld [vmem:[#allocation6 + $0xf8] sm:$0xff]
        %v1950 = vld [vmem:[#allocation6 + $0x100] sm:$0xff]
        %v1951 = vld [vmem:[#allocation6 + $0x108] sm:$0xff]
        %v1952 = vld [vmem:[#allocation6 + $0x110] sm:$0xff]
        %v1953 = vld [vmem:[#allocation6 + $0x118] sm:$0xff]
        %v1954 = vld [vmem:[#allocation6 + $0x120] sm:$0xff]
        %v1955 = vld [vmem:[#allocation6 + $0x128] sm:$0xff]
        %v1956 = vld [vmem:[#allocation6 + $0x130] sm:$0xff]
        %v1957 = vld [vmem:[#allocation6 + $0x138] sm:$0xff]
        %v1958 = vld [vmem:[#allocation6 + $0x140] sm:$0xff]
        %v1959 = vld [vmem:[#allocation6 + $0x148] sm:$0xff]
        %v1960 = vld [vmem:[#allocation6 + $0x150] sm:$0xff]
        %v1961 = vld [vmem:[#allocation6 + $0x158] sm:$0xff]
        %v1962 = vld [vmem:[#allocation6 + $0x160] sm:$0xff]
        %v1963 = vld [vmem:[#allocation6 + $0x168] sm:$0xff]
        %v1964 = vld [vmem:[#allocation6 + $0x170] sm:$0xff]
        %v1965 = vld [vmem:[#allocation6 + $0x178] sm:$0xff]
        %v1966 = vld [vmem:[#allocation6 + $0x180] sm:$0xff]
        %v1967 = vld [vmem:[#allocation6 + $0x188] sm:$0xff]
        %v1968 = vld [vmem:[#allocation6 + $0x190] sm:$0xff]
        %v1969 = vld [vmem:[#allocation6 + $0x198] sm:$0xff]
        %v1970 = vld [vmem:[#allocation6 + $0x1a0] sm:$0xff]
        %v1971 = vld [vmem:[#allocation6 + $0x1a8] sm:$0xff]
        %v1972 = vld [vmem:[#allocation6 + $0x1b0] sm:$0xff]
        %v1973 = vld [vmem:[#allocation6 + $0x1b8] sm:$0xff]
        %v1974 = vld [vmem:[#allocation6 + $0x1c0] sm:$0xff]
        %v1975 = vld [vmem:[#allocation6 + $0x1c8] sm:$0xff]
        %v1976 = vld [vmem:[#allocation6 + $0x1d0] sm:$0xff]
        %v1977 = vld [vmem:[#allocation6 + $0x1d8] sm:$0xff]
        %v1978 = vld [vmem:[#allocation6 + $0x1e0] sm:$0xff]
        %v1979 = vld [vmem:[#allocation6 + $0x1e8] sm:$0xff]
        %v1980 = vld [vmem:[#allocation6 + $0x1f0] sm:$0xff]
        %v1981 = vld [vmem:[#allocation6 + $0x1f8] sm:$0xff]
        %v1982 = vld [vmem:[%s5] sm:$0xff]
        %v1984 = vlaneseq
        %v1985 = vshrl.u32 %v1984, 7
        %v1986 = vsub.s32 0, %v1985
        %v1987 = vrot.slane %v1982, %v1986
        %v1988 = vlaneseq
        %v1989 = vshrl.u32 %v1988, 7
        %v1990 = vsub.s32 1, %v1989
        %v1991 = vrot.slane %v1982, %v1990
        %v1992 = vlaneseq
        %v1993 = vshrl.u32 %v1992, 7
        %v1994 = vsub.s32 2, %v1993
        %v1995 = vrot.slane %v1982, %v1994
        %v1996 = vlaneseq
        %v1997 = vshrl.u32 %v1996, 7
        %v1998 = vsub.s32 3, %v1997
        %v1999 = vrot.slane %v1982, %v1998
        %v2000 = vlaneseq
        %v2001 = vshrl.u32 %v2000, 7
        %v2002 = vsub.s32 4, %v2001
        %v2003 = vrot.slane %v1982, %v2002
        %v2004 = vlaneseq
        %v2005 = vshrl.u32 %v2004, 7
        %v2006 = vsub.s32 5, %v2005
        %v2007 = vrot.slane %v1982, %v2006
        %v2008 = vlaneseq
        %v2009 = vshrl.u32 %v2008, 7
        %v2010 = vsub.s32 6, %v2009
        %v2011 = vrot.slane %v1982, %v2010
        %v2012 = vlaneseq
        %v2013 = vshrl.u32 %v2012, 7
        %v2014 = vsub.s32 7, %v2013
        %v2015 = vrot.slane %v1982, %v2014
        %v2088 = vunpack.c.l.b16 %v1918
        %v2089 = vunpack.c.h.b16 %v1918
        %v2090 = vunpack.c.l.b16 %v1919
        %v2091 = vunpack.c.h.b16 %v1919
        %v2092 = vunpack.c.l.b16 %v1920
        %v2093 = vunpack.c.h.b16 %v1920
        %v2094 = vunpack.c.l.b16 %v1921
        %v2095 = vunpack.c.h.b16 %v1921
        %v2096 = vunpack.c.l.b16 %v1922
        %v2097 = vunpack.c.h.b16 %v1922
        %v2098 = vunpack.c.l.b16 %v1923
        %v2099 = vunpack.c.h.b16 %v1923
        %v2100 = vunpack.c.l.b16 %v1924
        %v2101 = vunpack.c.h.b16 %v1924
        %v2102 = vunpack.c.l.b16 %v1925
        %v2103 = vunpack.c.h.b16 %v1925
        %v2104 = vunpack.c.l.b16 %v1926
        %v2105 = vunpack.c.h.b16 %v1926
        %v2106 = vunpack.c.l.b16 %v1927
        %v2107 = vunpack.c.h.b16 %v1927
        %v2108 = vunpack.c.l.b16 %v1928
        %v2109 = vunpack.c.h.b16 %v1928
        %v2110 = vunpack.c.l.b16 %v1929
        %v2111 = vunpack.c.h.b16 %v1929
        %v2112 = vunpack.c.l.b16 %v1930
        %v2113 = vunpack.c.h.b16 %v1930
        %v2114 = vunpack.c.l.b16 %v1931
        %v2115 = vunpack.c.h.b16 %v1931
        %v2116 = vunpack.c.l.b16 %v1932
        %v2117 = vunpack.c.h.b16 %v1932
        %v2118 = vunpack.c.l.b16 %v1933
        %v2119 = vunpack.c.h.b16 %v1933
        %v2120 = vunpack.c.l.b16 %v1934
        %v2121 = vunpack.c.h.b16 %v1934
        %v2122 = vunpack.c.l.b16 %v1935
        %v2123 = vunpack.c.h.b16 %v1935
        %v2124 = vunpack.c.l.b16 %v1936
        %v2125 = vunpack.c.h.b16 %v1936
        %v2126 = vunpack.c.l.b16 %v1937
        %v2127 = vunpack.c.h.b16 %v1937
        %v2128 = vunpack.c.l.b16 %v1938
        %v2129 = vunpack.c.h.b16 %v1938
        %v2130 = vunpack.c.l.b16 %v1939
        %v2131 = vunpack.c.h.b16 %v1939
        %v2132 = vunpack.c.l.b16 %v1940
        %v2133 = vunpack.c.h.b16 %v1940
        %v2134 = vunpack.c.l.b16 %v1941
        %v2135 = vunpack.c.h.b16 %v1941
        %v2136 = vunpack.c.l.b16 %v1942
        %v2137 = vunpack.c.h.b16 %v1942
        %v2138 = vunpack.c.l.b16 %v1943
        %v2139 = vunpack.c.h.b16 %v1943
        %v2140 = vunpack.c.l.b16 %v1944
        %v2141 = vunpack.c.h.b16 %v1944
        %v2142 = vunpack.c.l.b16 %v1945
        %v2143 = vunpack.c.h.b16 %v1945
        %v2144 = vunpack.c.l.b16 %v1946
        %v2145 = vunpack.c.h.b16 %v1946
        %v2146 = vunpack.c.l.b16 %v1947
        %v2147 = vunpack.c.h.b16 %v1947
        %v2148 = vunpack.c.l.b16 %v1948
        %v2149 = vunpack.c.h.b16 %v1948
        %v2150 = vunpack.c.l.b16 %v1949
        %v2151 = vunpack.c.h.b16 %v1949
        %v2152 = vunpack.c.l.b16 %v1950
        %v2153 = vunpack.c.h.b16 %v1950
        %v2154 = vunpack.c.l.b16 %v1951
        %v2155 = vunpack.c.h.b16 %v1951
        %v2156 = vunpack.c.l.b16 %v1952
        %v2157 = vunpack.c.h.b16 %v1952
        %v2158 = vunpack.c.l.b16 %v1953
        %v2159 = vunpack.c.h.b16 %v1953
        %v2160 = vunpack.c.l.b16 %v1954
        %v2161 = vunpack.c.h.b16 %v1954
        %v2162 = vunpack.c.l.b16 %v1955
        %v2163 = vunpack.c.h.b16 %v1955
        %v2164 = vunpack.c.l.b16 %v1956
        %v2165 = vunpack.c.h.b16 %v1956
        %v2166 = vunpack.c.l.b16 %v1957
        %v2167 = vunpack.c.h.b16 %v1957
        %v2168 = vunpack.c.l.b16 %v1958
        %v2169 = vunpack.c.h.b16 %v1958
        %v2170 = vunpack.c.l.b16 %v1959
        %v2171 = vunpack.c.h.b16 %v1959
        %v2172 = vunpack.c.l.b16 %v1960
        %v2173 = vunpack.c.h.b16 %v1960
        %v2174 = vunpack.c.l.b16 %v1961
        %v2175 = vunpack.c.h.b16 %v1961
        %v2176 = vunpack.c.l.b16 %v1962
        %v2177 = vunpack.c.h.b16 %v1962
        %v2178 = vunpack.c.l.b16 %v1963
        %v2179 = vunpack.c.h.b16 %v1963
        %v2180 = vunpack.c.l.b16 %v1964
        %v2181 = vunpack.c.h.b16 %v1964
        %v2182 = vunpack.c.l.b16 %v1965
        %v2183 = vunpack.c.h.b16 %v1965
        %v2184 = vunpack.c.l.b16 %v1966
        %v2185 = vunpack.c.h.b16 %v1966
        %v2186 = vunpack.c.l.b16 %v1967
        %v2187 = vunpack.c.h.b16 %v1967
        %v2188 = vunpack.c.l.b16 %v1968
        %v2189 = vunpack.c.h.b16 %v1968
        %v2190 = vunpack.c.l.b16 %v1969
        %v2191 = vunpack.c.h.b16 %v1969
        %v2192 = vunpack.c.l.b16 %v1970
        %v2193 = vunpack.c.h.b16 %v1970
        %v2194 = vunpack.c.l.b16 %v1971
        %v2195 = vunpack.c.h.b16 %v1971
        %v2196 = vunpack.c.l.b16 %v1972
        %v2197 = vunpack.c.h.b16 %v1972
        %v2198 = vunpack.c.l.b16 %v1973
        %v2199 = vunpack.c.h.b16 %v1973
        %v2200 = vunpack.c.l.b16 %v1974
        %v2201 = vunpack.c.h.b16 %v1974
        %v2202 = vunpack.c.l.b16 %v1975
        %v2203 = vunpack.c.h.b16 %v1975
        %v2204 = vunpack.c.l.b16 %v1976
        %v2205 = vunpack.c.h.b16 %v1976
        %v2206 = vunpack.c.l.b16 %v1977
        %v2207 = vunpack.c.h.b16 %v1977
        %v2208 = vunpack.c.l.b16 %v1978
        %v2209 = vunpack.c.h.b16 %v1978
        %v2210 = vunpack.c.l.b16 %v1979
        %v2211 = vunpack.c.h.b16 %v1979
        %v2212 = vunpack.c.l.b16 %v1980
        %v2213 = vunpack.c.h.b16 %v1980
        %v2214 = vunpack.c.l.b16 %v1981
        %v2215 = vunpack.c.h.b16 %v1981
        %v2216 = vpack.c.b16 %v2096, %v2088
        %v2217 = vpack.c.b16 %v2097, %v2089
        %v2218 = vpack.c.b16 %v2098, %v2090
        %v2219 = vpack.c.b16 %v2099, %v2091
        %v2220 = vpack.c.b16 %v2100, %v2092
        %v2221 = vpack.c.b16 %v2101, %v2093
        %v2222 = vpack.c.b16 %v2102, %v2094
        %v2223 = vpack.c.b16 %v2103, %v2095
        %v2224 = vpack.c.b16 %v2112, %v2104
        %v2225 = vpack.c.b16 %v2113, %v2105
        %v2226 = vpack.c.b16 %v2114, %v2106
        %v2227 = vpack.c.b16 %v2115, %v2107
        %v2228 = vpack.c.b16 %v2116, %v2108
        %v2229 = vpack.c.b16 %v2117, %v2109
        %v2230 = vpack.c.b16 %v2118, %v2110
        %v2231 = vpack.c.b16 %v2119, %v2111
        %v2232 = vpack.c.b16 %v2128, %v2120
        %v2233 = vpack.c.b16 %v2129, %v2121
        %v2234 = vpack.c.b16 %v2130, %v2122
        %v2235 = vpack.c.b16 %v2131, %v2123
        %v2236 = vpack.c.b16 %v2132, %v2124
        %v2237 = vpack.c.b16 %v2133, %v2125
        %v2238 = vpack.c.b16 %v2134, %v2126
        %v2239 = vpack.c.b16 %v2135, %v2127
        %v2240 = vpack.c.b16 %v2144, %v2136
        %v2241 = vpack.c.b16 %v2145, %v2137
        %v2242 = vpack.c.b16 %v2146, %v2138
        %v2243 = vpack.c.b16 %v2147, %v2139
        %v2244 = vpack.c.b16 %v2148, %v2140
        %v2245 = vpack.c.b16 %v2149, %v2141
        %v2246 = vpack.c.b16 %v2150, %v2142
        %v2247 = vpack.c.b16 %v2151, %v2143
        %v2248 = vpack.c.b16 %v2160, %v2152
        %v2249 = vpack.c.b16 %v2161, %v2153
        %v2250 = vpack.c.b16 %v2162, %v2154
        %v2251 = vpack.c.b16 %v2163, %v2155
        %v2252 = vpack.c.b16 %v2164, %v2156
        %v2253 = vpack.c.b16 %v2165, %v2157
        %v2254 = vpack.c.b16 %v2166, %v2158
        %v2255 = vpack.c.b16 %v2167, %v2159
        %v2256 = vpack.c.b16 %v2176, %v2168
        %v2257 = vpack.c.b16 %v2177, %v2169
        %v2258 = vpack.c.b16 %v2178, %v2170
        %v2259 = vpack.c.b16 %v2179, %v2171
        %v2260 = vpack.c.b16 %v2180, %v2172
        %v2261 = vpack.c.b16 %v2181, %v2173
        %v2262 = vpack.c.b16 %v2182, %v2174
        %v2263 = vpack.c.b16 %v2183, %v2175
        %v2264 = vpack.c.b16 %v2192, %v2184
        %v2265 = vpack.c.b16 %v2193, %v2185
        %v2266 = vpack.c.b16 %v2194, %v2186
        %v2267 = vpack.c.b16 %v2195, %v2187
        %v2268 = vpack.c.b16 %v2196, %v2188
        %v2269 = vpack.c.b16 %v2197, %v2189
        %v2270 = vpack.c.b16 %v2198, %v2190
        %v2271 = vpack.c.b16 %v2199, %v2191
        %v2272 = vpack.c.b16 %v2208, %v2200
        %v2273 = vpack.c.b16 %v2209, %v2201
        %v2274 = vpack.c.b16 %v2210, %v2202
        %v2275 = vpack.c.b16 %v2211, %v2203
        %v2276 = vpack.c.b16 %v2212, %v2204
        %v2277 = vpack.c.b16 %v2213, %v2205
        %v2278 = vpack.c.b16 %v2214, %v2206
        %v2279 = vpack.c.b16 %v2215, %v2207
        %2344 = vmatprep.subr.bf16.mxu0 %v2217
        %2345 = vmatpush1.bf16.msra.mxu0 %v2216
        %2346 = vmatprep.subr.bf16.mxu0 %v2225
        %2347 = vmatpush1.bf16.msra.mxu0 %v2224
        %2348 = vmatprep.subr.bf16.mxu0 %v2233
        %2349 = vmatpush1.bf16.msra.mxu0 %v2232
        %2350 = vmatprep.subr.bf16.mxu0 %v2241
        %2351 = vmatpush1.bf16.msra.mxu0 %v2240
        %2352 = vmatprep.subr.bf16.mxu0 %v2249
        %2353 = vmatpush1.bf16.msra.mxu0 %v2248
        %2354 = vmatprep.subr.bf16.mxu0 %v2257
        %2355 = vmatpush1.bf16.msra.mxu0 %v2256
        %2356 = vmatprep.subr.bf16.mxu0 %v2265
        %2357 = vmatpush1.bf16.msra.mxu0 %v2264
        %2358 = vmatprep.subr.bf16.mxu0 %v2273
        %2359 = vmatpush1.bf16.msra.mxu0 %v2272
        %2360 = vmatprep.subr.bf16.mxu0 0
        %2361 = vmatpush1.bf16.msra.mxu0 0
        %2362 = vmatprep.subr.bf16.mxu0 0
        %2363 = vmatpush1.bf16.msra.mxu0 0
        %2364 = vmatprep.subr.bf16.mxu0 0
        %2365 = vmatpush1.bf16.msra.mxu0 0
        %2366 = vmatprep.subr.bf16.mxu0 0
        %2367 = vmatpush1.bf16.msra.mxu0 0
        %2368 = vmatprep.subr.bf16.mxu0 0
        %2369 = vmatpush1.bf16.msra.mxu0 0
        %2370 = vmatprep.subr.bf16.mxu0 0
        %2371 = vmatpush1.bf16.msra.mxu0 0
        %2372 = vmatprep.subr.bf16.mxu0 0
        %2373 = vmatpush1.bf16.msra.mxu0 0
        %2374 = vmatprep.subr.bf16.mxu0 0
        %2375 = vmatpush1.bf16.msra.mxu0 0
        %2376 = vmatprep.mubr.bf16.mxu0 0
        %2377 = vmatmul.mubr.bf16.gmra.mrb[0].mxu0 %v1917
        %v2378 = vpop.f32.mrb[0].mxu0
        %v2379 = vadd.f32 %v1987, %v2378
        %v2380 = vpop.f32.mrb[0].mxu0
        %v2381 = vadd.f32 %v1991, %v2380
        %v2382 = vpop.f32.mrb[0].mxu0
        %v2383 = vpop.f32.mrb[0].mxu0
        %2384 = vdwg.mxu0
        %2385 = vmatprep.subr.bf16.mxu0 %v2219
        %2386 = vmatpush1.bf16.msra.mxu0 %v2218
        %2387 = vmatprep.subr.bf16.mxu0 %v2227
        %2388 = vmatpush1.bf16.msra.mxu0 %v2226
        %2389 = vmatprep.subr.bf16.mxu0 %v2235
        %2390 = vmatpush1.bf16.msra.mxu0 %v2234
        %2391 = vmatprep.subr.bf16.mxu0 %v2243
        %2392 = vmatpush1.bf16.msra.mxu0 %v2242
        %2393 = vmatprep.subr.bf16.mxu0 %v2251
        %2394 = vmatpush1.bf16.msra.mxu0 %v2250
        %2395 = vmatprep.subr.bf16.mxu0 %v2259
        %2396 = vmatpush1.bf16.msra.mxu0 %v2258
        %2397 = vmatprep.subr.bf16.mxu0 %v2267
        %2398 = vmatpush1.bf16.msra.mxu0 %v2266
        %2399 = vmatprep.subr.bf16.mxu0 %v2275
        %2400 = vmatpush1.bf16.msra.mxu0 %v2274
        %2401 = vmatprep.subr.bf16.mxu0 0
        %2402 = vmatpush1.bf16.msra.mxu0 0
        %2403 = vmatprep.subr.bf16.mxu0 0
        %2404 = vmatpush1.bf16.msra.mxu0 0
        %2405 = vmatprep.subr.bf16.mxu0 0
        %2406 = vmatpush1.bf16.msra.mxu0 0
        %2407 = vmatprep.subr.bf16.mxu0 0
        %2408 = vmatpush1.bf16.msra.mxu0 0
        %2409 = vmatprep.subr.bf16.mxu0 0
        %2410 = vmatpush1.bf16.msra.mxu0 0
        %2411 = vmatprep.subr.bf16.mxu0 0
        %2412 = vmatpush1.bf16.msra.mxu0 0
        %2413 = vmatprep.subr.bf16.mxu0 0
        %2414 = vmatpush1.bf16.msra.mxu0 0
        %2415 = vmatprep.subr.bf16.mxu0 0
        %2416 = vmatpush1.bf16.msra.mxu0 0
        %2417 = vmatprep.mubr.bf16.mxu0 0
        %2418 = vmatmul.mubr.bf16.gmra.mrb[0].mxu0 %v1917
        %v2419 = vpop.f32.mrb[0].mxu0
        %v2420 = vadd.f32 %v1995, %v2419
        %v2421 = vpop.f32.mrb[0].mxu0
        %v2422 = vadd.f32 %v1999, %v2421
        %v2423 = vpop.f32.mrb[0].mxu0
        %v2424 = vpop.f32.mrb[0].mxu0
        %2425 = vdwg.mxu0
        %2426 = vmatprep.subr.bf16.mxu0 %v2221
        %2427 = vmatpush1.bf16.msra.mxu0 %v2220
        %2428 = vmatprep.subr.bf16.mxu0 %v2229
        %2429 = vmatpush1.bf16.msra.mxu0 %v2228
        %2430 = vmatprep.subr.bf16.mxu0 %v2237
        %2431 = vmatpush1.bf16.msra.mxu0 %v2236
        %2432 = vmatprep.subr.bf16.mxu0 %v2245
        %2433 = vmatpush1.bf16.msra.mxu0 %v2244
        %2434 = vmatprep.subr.bf16.mxu0 %v2253
        %2435 = vmatpush1.bf16.msra.mxu0 %v2252
        %2436 = vmatprep.subr.bf16.mxu0 %v2261
        %2437 = vmatpush1.bf16.msra.mxu0 %v2260
        %2438 = vmatprep.subr.bf16.mxu0 %v2269
        %2439 = vmatpush1.bf16.msra.mxu0 %v2268
        %2440 = vmatprep.subr.bf16.mxu0 %v2277
        %2441 = vmatpush1.bf16.msra.mxu0 %v2276
        %2442 = vmatprep.subr.bf16.mxu0 0
        %2443 = vmatpush1.bf16.msra.mxu0 0
        %2444 = vmatprep.subr.bf16.mxu0 0
        %2445 = vmatpush1.bf16.msra.mxu0 0
        %2446 = vmatprep.subr.bf16.mxu0 0
        %2447 = vmatpush1.bf16.msra.mxu0 0
        %2448 = vmatprep.subr.bf16.mxu0 0
        %2449 = vmatpush1.bf16.msra.mxu0 0
        %2450 = vmatprep.subr.bf16.mxu0 0
        %2451 = vmatpush1.bf16.msra.mxu0 0
        %2452 = vmatprep.subr.bf16.mxu0 0
        %2453 = vmatpush1.bf16.msra.mxu0 0
        %2454 = vmatprep.subr.bf16.mxu0 0
        %2455 = vmatpush1.bf16.msra.mxu0 0
        %2456 = vmatprep.subr.bf16.mxu0 0
        %2457 = vmatpush1.bf16.msra.mxu0 0
        %2458 = vmatprep.mubr.bf16.mxu0 0
        %2459 = vmatmul.mubr.bf16.gmra.mrb[0].mxu0 %v1917
        %v2460 = vpop.f32.mrb[0].mxu0
        %v2461 = vadd.f32 %v2003, %v2460
        %v2462 = vpop.f32.mrb[0].mxu0
        %v2463 = vadd.f32 %v2007, %v2462
        %v2464 = vpop.f32.mrb[0].mxu0
        %v2465 = vpop.f32.mrb[0].mxu0
        %2466 = vdwg.mxu0
        %2467 = vmatprep.subr.bf16.mxu0 %v2223
        %2468 = vmatpush1.bf16.msra.mxu0 %v2222
        %2469 = vmatprep.subr.bf16.mxu0 %v2231
        %2470 = vmatpush1.bf16.msra.mxu0 %v2230
        %2471 = vmatprep.subr.bf16.mxu0 %v2239
        %2472 = vmatpush1.bf16.msra.mxu0 %v2238
        %2473 = vmatprep.subr.bf16.mxu0 %v2247
        %2474 = vmatpush1.bf16.msra.mxu0 %v2246
        %2475 = vmatprep.subr.bf16.mxu0 %v2255
        %2476 = vmatpush1.bf16.msra.mxu0 %v2254
        %2477 = vmatprep.subr.bf16.mxu0 %v2263
        %2478 = vmatpush1.bf16.msra.mxu0 %v2262
        %2479 = vmatprep.subr.bf16.mxu0 %v2271
        %2480 = vmatpush1.bf16.msra.mxu0 %v2270
        %2481 = vmatprep.subr.bf16.mxu0 %v2279
        %2482 = vmatpush1.bf16.msra.mxu0 %v2278
        %2483 = vmatprep.subr.bf16.mxu0 0
        %2484 = vmatpush1.bf16.msra.mxu0 0
        %2485 = vmatprep.subr.bf16.mxu0 0
        %2486 = vmatpush1.bf16.msra.mxu0 0
        %2487 = vmatprep.subr.bf16.mxu0 0
        %2488 = vmatpush1.bf16.msra.mxu0 0
        %2489 = vmatprep.subr.bf16.mxu0 0
        %2490 = vmatpush1.bf16.msra.mxu0 0
        %2491 = vmatprep.subr.bf16.mxu0 0
        %2492 = vmatpush1.bf16.msra.mxu0 0
        %2493 = vmatprep.subr.bf16.mxu0 0
        %2494 = vmatpush1.bf16.msra.mxu0 0
        %2495 = vmatprep.subr.bf16.mxu0 0
        %2496 = vmatpush1.bf16.msra.mxu0 0
        %2497 = vmatprep.subr.bf16.mxu0 0
        %2498 = vmatpush1.bf16.msra.mxu0 0
        %2499 = vmatprep.mubr.bf16.mxu0 0
        %2500 = vmatmul.mubr.bf16.gmra.mrb[0].mxu0 %v1917
        %v2501 = vpop.f32.mrb[0].mxu0
        %v2502 = vadd.f32 %v2011, %v2501
        %v2503 = vpop.f32.mrb[0].mxu0
        %v2504 = vadd.f32 %v2015, %v2503
        %v2505 = vpop.f32.mrb[0].mxu0
        %v2506 = vpop.f32.mrb[0].mxu0
        %2507 = vdwg.mxu0
        %v2508 = vmul.f32 %v2379, 0.5
        %v2509 = vmul.f32 %v2381, 0.5
        %v2510 = vmul.f32 %v2420, 0.5
        %v2511 = vmul.f32 %v2422, 0.5
        %v2512 = vmul.f32 %v2461, 0.5
        %v2513 = vmul.f32 %v2463, 0.5
        %v2514 = vmul.f32 %v2502, 0.5
        %v2515 = vmul.f32 %v2504, 0.5
        %v2516 = vtanh.pop %v2508
        %v2517 = vtanh.pop %v2509
        %v2518 = vtanh.pop %v2510
        %v2519 = vtanh.pop %v2511
        %v2520 = vtanh.pop %v2512
        %v2521 = vtanh.pop %v2513
        %v2522 = vtanh.pop %v2514
        %v2523 = vtanh.pop %v2515
        %v2524 = vmul.f32 %v2516, 0.5
        %v2525 = vmul.f32 %v2517, 0.5
        %v2526 = vmul.f32 %v2518, 0.5
        %v2527 = vmul.f32 %v2519, 0.5
        %v2528 = vmul.f32 %v2520, 0.5
        %v2529 = vmul.f32 %v2521, 0.5
        %v2530 = vmul.f32 %v2522, 0.5
        %v2531 = vmul.f32 %v2523, 0.5
        %v2532 = vadd.f32 %v2524, 0.5
        %v2533 = vadd.f32 %v2525, 0.5
        %v2534 = vadd.f32 %v2526, 0.5
        %v2535 = vadd.f32 %v2527, 0.5
        %v2536 = vadd.f32 %v2528, 0.5
        %v2537 = vadd.f32 %v2529, 0.5
        %v2538 = vadd.f32 %v2530, 0.5
        %v2539 = vadd.f32 %v2531, 0.5
        %2540 = vst [vmem:[%s295] sm:$0xff] %v2532
        %2541 = vst [vmem:[%s295 + $0x8] sm:$0xff] %v2533
        %2542 = vst [vmem:[%s295 + $0x10] sm:$0xff] %v2534
        %2543 = vst [vmem:[%s295 + $0x18] sm:$0xff] %v2535
        %2544 = vst [vmem:[%s295 + $0x20] sm:$0xff] %v2536
        %2545 = vst [vmem:[%s295 + $0x28] sm:$0xff] %v2537
        %2546 = vst [vmem:[%s295 + $0x30] sm:$0xff] %v2538
        %2547 = vst [vmem:[%s295 + $0x38] sm:$0xff] %v2539
        %p2548 = scmp.lt.s32.totalorder %s19, 1
        %s2549 = scalar_select %p2548, %s19, 1
        %s2550 = smul.addr %s2549, 8
        %s2551 = smul.addr %s2550, 8
        %s2552 = scalar_lea.vmem %s6, %s2551
        // Predicated region
        $region57: #{autoencoder_forward.1} parent=43 // pred_check
          %p2553 = pneg %p168
        $region58: #{autoencoder_forward.1} parent=43 // pred_check_branch
          %2555 = sbr.rel (%p2553) target = $region60
        $region59: #{autoencoder_forward.1} parent=43 // pred_region
          _
        $region60: #{autoencoder_forward.1} parent=43 // pred_fallthru
          _
      $region44: #{autoencoder_forward.1} parent=5 // pred_fallthru
        _
      %p2556 = scmp.le.s32.totalorder 2, %s14
      // Predicated region
      $region61: #{autoencoder_forward.1} parent=5 // pred_check
        %p2557 = pneg %p2556
      $region62: #{autoencoder_forward.1} parent=5 // pred_check_branch
        %2559 = sbr.rel (%p2557) target = $region64
      $region63: #{autoencoder_forward.1} parent=5 // pred_region
        %s2560 = ssub.s32 %s14, 2
        // Predicated region
        $region65: #{autoencoder_forward.1} parent=63 // pred_check
          %p2561 = pneg %p174
        $region66: #{autoencoder_forward.1} parent=63 // pred_check_branch
          %2563 = sbr.rel (%p2561) target = $region68
        $region67: #{autoencoder_forward.1} parent=63 // pred_region
          %p2564 = scmp.lt.s32.totalorder %s20, 1
          %s2565 = scalar_select %p2564, %s20, 1
          %s2566 = smul.addr %s2565, 8
          %s2567 = smul.addr %s2566, 8
          %s2568 = scalar_lea.vmem %s6, %s2567
        $region68: #{autoencoder_forward.1} parent=63 // pred_fallthru
          _
      $region64: #{autoencoder_forward.1} parent=5 // pred_fallthru
        _
    $region6: #{autoencoder_forward.1} parent=1 // loop_footer
      %s18 = sadd.s32 1, %s14
    $region7: #{autoencoder_forward.1} parent=1 // loop_footer_branch
      %13 = sbr.rel target = $region3
    $region8: #{autoencoder_forward.1} parent=1 // loop_exit
      _
    %2569 = vsyncpa [#allocation3], 1
    %s2570 = scalar_lea.sflag [#allocation3], 1
    %2571 = vsyncpa %s2570, 1
    %2572 = vsyncpa [#allocation5], 1

</llo_original>
